<compile_context>
chip_gen: v6e
topology: v6e:2x2x1
jax: 0.10.0
libtpu: 0.0.40
codegen_flags: <defaults>
</compile_context>

<pallas_src>
import jax
import jax.numpy as jnp
import numpy as np
from jax.experimental import pallas as pl
from jax.experimental.pallas import tpu as pltpu

NCORES = 2            # leading "parallel" grid axis (v7x megacore; loop elsewhere)
TM = 1024             # output positions (lane axis) per tile
TK_CAP = 512          # max contraction-tile size (VMEM headroom on v7x)
TMB_CAP = 8192        # max tile for the BN+ReLU pass


def _triple(v):
    return tuple(v) if isinstance(v, (tuple, list)) else (v, v, v)


def _round_up(x, m):
    return (x + m - 1) // m * m


def _largest_tile(total, cap, quantum=128):
    """Largest multiple of `quantum` that divides `total` and is <= cap."""
    t = max(quantum, min(total, cap) // quantum * quantum)
    while total % t:
        t -= quantum
    return t


# ---------------------------------------------------------------------------
# Kernel A: conv as (Cout, K) @ (K, M) matmul, accumulated over K tiles into
# the f32 output block; per-channel sum / sum-of-squares (training-mode
# BatchNorm batch statistics) accumulated per core across M tiles.
# ---------------------------------------------------------------------------
def _conv_stats_kernel(p_ref, w_ref, y_ref, s_ref, ss_ref):
    j = pl.program_id(1)      # M tile within this core   (arbitrary)
    k = pl.program_id(2)      # contraction (K) tile      (arbitrary, innermost)
    nk = pl.num_programs(2)

    @pl.when(k == 0)
    def _():
        y_ref[...] = jnp.zeros_like(y_ref)

    # bf16 MXU inputs, f32 accumulation straight into the lane-dense output block.
    y_ref[...] += jnp.dot(w_ref[...], p_ref[...],
                          preferred_element_type=jnp.float32)

    @pl.when((j == 0) & (k == 0))
    def _():
        s_ref[...] = jnp.zeros_like(s_ref)
        ss_ref[...] = jnp.zeros_like(ss_ref)

    @pl.when(k == nk - 1)
    def _():
        y = y_ref[...]
        # Zero-padded rows/cols contribute exactly zero (no conv bias added),
        # so no masking is needed; divide by the true element count in glue.
        s_ref[...] += jnp.sum(y, axis=1, keepdims=True)
        ss_ref[...] += jnp.sum(y * y, axis=1, keepdims=True)


# ---------------------------------------------------------------------------
# Kernel B: fused affine batchnorm (precomputed per-channel scale/shift,
# broadcast along the 128-lane M axis) + ReLU, in place on y.
# ---------------------------------------------------------------------------
def _bn_relu_kernel(y_ref, scale_ref, shift_ref, o_ref):
    o_ref[...] = jnp.maximum(y_ref[...] * scale_ref[...] + shift_ref[...], 0.0)


def _im2col_km(x, k_size, stride, pad, dil):
    """x: (N, Cin, D, H, W) -> patches (Cin*kvol, N*Do*Ho*Wo); row = ci*kvol + kidx."""
    N, C, D, H, W = x.shape
    kd, kh, kw = k_size
    sd, sh, sw = stride
    pd, ph, pw = pad
    dd, dh, dw = dil
    Do = (D + 2 * pd - dd * (kd - 1) - 1) // sd + 1
    Ho = (H + 2 * ph - dh * (kh - 1) - 1) // sh + 1
    Wo = (W + 2 * pw - dw * (kw - 1) - 1) // sw + 1
    xp = jnp.pad(x, ((0, 0), (0, 0), (pd, pd), (ph, ph), (pw, pw)))
    slices = []
    for a in range(kd):
        for b in range(kh):
            for c in range(kw):
                slices.append(xp[:, :,
                                 a * dd: a * dd + (Do - 1) * sd + 1: sd,
                                 b * dh: b * dh + (Ho - 1) * sh + 1: sh,
                                 c * dw: c * dw + (Wo - 1) * sw + 1: sw])
    # (N, C, kvol, Do, Ho, Wo) -> (C, kvol, N, Do, Ho, Wo) -> (K, M)
    pt = jnp.stack(slices, axis=2)
    pt = jnp.transpose(pt, (1, 2, 0, 3, 4, 5))
    return pt.reshape(C * kd * kh * kw, N * Do * Ho * Wo), (Do, Ho, Wo)


def conv_block_forward(x, weight, bias, gamma, beta, *, k_size, stride, p_size,
                       dilation=1, eps=1e-5, compute_dtype=jnp.bfloat16):
    """Conv3d(+bias) -> BatchNorm3d (training-mode batch stats) -> ReLU, NCDHW.

    Note: under train-mode BatchNorm the conv bias cancels exactly (the mean
    subtraction removes the per-channel constant), so `bias` is accepted for
    interface parity but intentionally not computed.
    """
    del bias
    k_size, stride, p_size, dilation = map(_triple, (k_size, stride, p_size, dilation))
    N, Cin, D, H, W = x.shape
    Cout = weight.shape[0]
    kvol = k_size[0] * k_size[1] * k_size[2]
    K = Cin * kvol

    # ---- im2col in the transposed (K, M) layout, directly in compute dtype --
    patches, (Do, Ho, Wo) = _im2col_km(x.astype(compute_dtype), k_size, stride,
                                       p_size, dilation)
    M = N * Do * Ho * Wo
    M_pad = _round_up(M, NCORES * TM)
    K_pad = _round_up(K, 128)
    Cout_pad = _round_up(Cout, 8)

    patches = jnp.pad(patches, ((0, K_pad - K), (0, M_pad - M)))
    w_mat = jnp.pad(weight.reshape(Cout, K).astype(compute_dtype),
                    ((0, Cout_pad - Cout), (0, K_pad - K)))

    tiles = M_pad // TM
    tiles_per_core = tiles // NCORES
    TK = _largest_tile(K_pad, TK_CAP)
    grid = (NCORES, tiles_per_core, K_pad // TK)

    def m_idx(c, j):
        return c * tiles_per_core + j

    # --- conv matmul + per-core batch statistics -----------------------------
    y, psum, psumsq = pl.pallas_call(
        _conv_stats_kernel,
        out_shape=(jax.ShapeDtypeStruct((Cout_pad, M_pad), jnp.float32),
                   jax.ShapeDtypeStruct((NCORES, Cout_pad, 1), jnp.float32),
                   jax.ShapeDtypeStruct((NCORES, Cout_pad, 1), jnp.float32)),
        grid_spec=pltpu.PrefetchScalarGridSpec(
            num_scalar_prefetch=0, grid=grid,
            in_specs=[pl.BlockSpec((TK, TM), lambda c, j, k: (k, m_idx(c, j))),
                      pl.BlockSpec((Cout_pad, TK), lambda c, j, k: (0, k))],
            out_specs=[pl.BlockSpec((Cout_pad, TM),
                                    lambda c, j, k: (0, m_idx(c, j))),
                       pl.BlockSpec((None, Cout_pad, 1), lambda c, j, k: (c, 0, 0)),
                       pl.BlockSpec((None, Cout_pad, 1), lambda c, j, k: (c, 0, 0))]),
        compiler_params=pltpu.CompilerParams(
            dimension_semantics=("parallel", "arbitrary", "arbitrary"),
            vmem_limit_bytes=48 * 1024 * 1024),
    )(patches, w_mat)

    # --- tiny per-channel scalar glue: fold BN into scale/shift --------------
    inv_count = 1.0 / float(M)
    ssum = jnp.sum(psum, axis=(0, 2))          # (Cout_pad,)
    ssq = jnp.sum(psumsq, axis=(0, 2))
    mean = ssum * inv_count
    var = jnp.maximum(ssq * inv_count - mean * mean, 0.0)   # biased var (train BN)
    gamma_p = jnp.pad(gamma.astype(jnp.float32), (0, Cout_pad - Cout))
    beta_p = jnp.pad(beta.astype(jnp.float32), (0, Cout_pad - Cout))
    scale = gamma_p / jnp.sqrt(var + eps)
    shift = beta_p - mean * scale

    # --- fused batchnorm + ReLU, in place on y --------------------------------
    TMB = _largest_tile(M_pad, TMB_CAP)
    out = pl.pallas_call(
        _bn_relu_kernel,
        out_shape=jax.ShapeDtypeStruct((Cout_pad, M_pad), jnp.float32),
        grid_spec=pltpu.PrefetchScalarGridSpec(
            num_scalar_prefetch=0, grid=(M_pad // TMB,),
            in_specs=[pl.BlockSpec((Cout_pad, TMB), lambda i: (0, i)),
                      pl.BlockSpec((Cout_pad, 1), lambda i: (0, 0)),
                      pl.BlockSpec((Cout_pad, 1), lambda i: (0, 0))],
            out_specs=pl.BlockSpec((Cout_pad, TMB), lambda i: (0, i))),
        compiler_params=pltpu.CompilerParams(dimension_semantics=("parallel",)),
        input_output_aliases={0: 0},     # reuse y's HBM buffer for the result
    )(y, scale.reshape(Cout_pad, 1), shift.reshape(Cout_pad, 1))

    out = out[:Cout, :M].reshape(Cout, N, Do, Ho, Wo)
    # Leading-axes swap only (cheap) back to PyTorch NCDHW.
    return jnp.transpose(out, (1, 0, 2, 3, 4))


def _reference(x, weight, bias, gamma, beta, *, k_size, stride, p_size, dilation,
               eps=1e-5):
    k_size, stride, p_size, dilation = map(_triple, (k_size, stride, p_size, dilation))
    dn = jax.lax.conv_dimension_numbers(x.shape, weight.shape,
                                        ("NCDHW", "OIDHW", "NCDHW"))
    y = jax.lax.conv_general_dilated(
        x, weight, window_strides=stride,
        padding=[(p, p) for p in p_size], rhs_dilation=dilation,
        dimension_numbers=dn) + bias.reshape(1, -1, 1, 1, 1)
    mean = y.mean(axis=(0, 2, 3, 4), keepdims=True)
    var = ((y - mean) ** 2).mean(axis=(0, 2, 3, 4), keepdims=True)
    yn = (y - mean) / jnp.sqrt(var + eps)
    yn = yn * gamma.reshape(1, -1, 1, 1, 1) + beta.reshape(1, -1, 1, 1, 1)
    return jnp.maximum(yn, 0.0)


if __name__ == "__main__":
    # conv_block(chann_in=4, chann_out=8, k_size=3, stride=1, p_size=1)
    N, Cin, Cout, S, K = 2, 4, 8, 12, 3
    key = jax.random.PRNGKey(0)
    kw_, kb, kg, kbt, kx = jax.random.split(key, 5)
    weight = jax.random.normal(kw_, (Cout, Cin, K, K, K), jnp.float32) * 0.1
    bias = jax.random.normal(kb, (Cout,), jnp.float32) * 0.1
    gamma = 1.0 + 0.1 * jax.random.normal(kg, (Cout,), jnp.float32)
    beta = 0.1 * jax.random.normal(kbt, (Cout,), jnp.float32)
    x = jax.random.normal(kx, (N, Cin, S, S, S), jnp.float32)

    fwd = jax.jit(conv_block_forward,
                  static_argnames=("k_size", "stride", "p_size", "dilation",
                                   "eps", "compute_dtype"))

    ref = _reference(x, weight, bias, gamma, beta,
                     k_size=K, stride=1, p_size=1, dilation=1)

    # f32 MXU path: tight check of the kernel math (bias cancellation, stats).
    out_f32 = jax.block_until_ready(
        fwd(x, weight, bias, gamma, beta, k_size=K, stride=1, p_size=1,
            dilation=1, eps=1e-5, compute_dtype=jnp.float32))
    np.testing.assert_allclose(np.asarray(out_f32), np.asarray(ref),
                               rtol=1e-3, atol=1e-3)

    # bf16 MXU path (default / fast): looser tolerance for bf16 conv inputs.
    out_bf16 = jax.block_until_ready(
        fwd(x, weight, bias, gamma, beta, k_size=K, stride=1, p_size=1,
            dilation=1, eps=1e-5, compute_dtype=jnp.bfloat16))
    np.testing.assert_allclose(np.asarray(out_bf16), np.asarray(ref),
                               rtol=2e-2, atol=2e-2)

    print("KERNEL_OK")
</pallas_src>

<mosaic_0001>
module attributes {stable_mosaic.version = 11 : i64} {
  func.func @_conv_stats_kernel(%arg0: i32, %arg1: i32, %arg2: i32, %arg3: memref<128x1024xf32, #tpu.memory_space<vmem>>, %arg4: memref<8x128xf32, #tpu.memory_space<vmem>>, %arg5: memref<8x1024xf32, #tpu.memory_space<vmem>>, %arg6: memref<1x8x1xf32, #tpu.memory_space<vmem>>, %arg7: memref<1x8x1xf32, #tpu.memory_space<vmem>>) attributes {dimension_semantics = [#tpu.dimension_semantics<parallel>, #tpu.dimension_semantics<arbitrary>, #tpu.dimension_semantics<arbitrary>], iteration_bounds = array<i64: 2, 2, 1>, scalar_prefetch = 0 : i64, scratch_operands = 0 : i64, tpu.core_type = #tpu.core_type<tc>, window_params = [{transform_indices = @transform_0, window_bounds = array<i64: 128, 1024>}, {transform_indices = @transform_1, window_bounds = array<i64: 8, 128>}, {transform_indices = @transform_2, window_bounds = array<i64: 8, 1024>}, {transform_indices = @transform_3, window_bounds = array<i64: 1, 8, 1>}, {transform_indices = @transform_4, window_bounds = array<i64: 1, 8, 1>}]} {
    %c0_i32 = arith.constant 0 : i32
    %0 = arith.cmpi eq, %arg2, %c0_i32 : i32
    %1 = arith.extui %0 : i1 to i32
    %c0_i32_0 = arith.constant 0 : i32
    %2 = arith.cmpi ne, %1, %c0_i32_0 : i32
    scf.if %2 {
      %cst_13 = arith.constant 0.000000e+00 : f32
      %17 = vector.broadcast %cst_13 : f32 to vector<8x1024xf32>
      %c0_14 = arith.constant 0 : index
      %c0_15 = arith.constant 0 : index
      %18 = vector.load %arg5[%c0_14, %c0_15] : memref<8x1024xf32, #tpu.memory_space<vmem>>, vector<8x1024xf32>
      tpu.vector_store %arg5[%c0_14, %c0_15], %17 {strides = array<i32>} : memref<8x1024xf32, #tpu.memory_space<vmem>>, vector<8x1024xf32>,
    } else {
    }
    %c0 = arith.constant 0 : index
    %c0_1 = arith.constant 0 : index
    %3 = vector.load %arg5[%c0, %c0_1] : memref<8x1024xf32, #tpu.memory_space<vmem>>, vector<8x1024xf32>
    %c0_2 = arith.constant 0 : index
    %c0_3 = arith.constant 0 : index
    %4 = vector.load %arg4[%c0_2, %c0_3] : memref<8x128xf32, #tpu.memory_space<vmem>>, vector<8x128xf32>
    %c0_4 = arith.constant 0 : index
    %c0_5 = arith.constant 0 : index
    %5 = vector.load %arg3[%c0_4, %c0_5] : memref<128x1024xf32, #tpu.memory_space<vmem>>, vector<128x1024xf32>
    %cst = arith.constant dense<0.000000e+00> : vector<8x1024xf32>
    %6 = tpu.matmul %4, %5, %cst {dimension_numbers = #tpu.dot_dimension_numbers<[1], [0], [0], [1], [0, 0, 1, 1], [], []>} : vector<8x128xf32>, vector<128x1024xf32>, vector<8x1024xf32> -> vector<8x1024xf32>
    %7 = arith.addf %3, %6 : vector<8x1024xf32>
    %c0_6 = arith.constant 0 : index
    %c0_7 = arith.constant 0 : index
    %8 = vector.load %arg5[%c0_6, %c0_7] : memref<8x1024xf32, #tpu.memory_space<vmem>>, vector<8x1024xf32>
    tpu.vector_store %arg5[%c0_6, %c0_7], %7 {strides = array<i32>} : memref<8x1024xf32, #tpu.memory_space<vmem>>, vector<8x1024xf32>,
    %c0_i32_8 = arith.constant 0 : i32
    %9 = arith.cmpi eq, %arg1, %c0_i32_8 : i32
    %c0_i32_9 = arith.constant 0 : i32
    %10 = arith.cmpi eq, %arg2, %c0_i32_9 : i32
    %11 = arith.andi %9, %10 : i1
    %12 = arith.extui %11 : i1 to i32
    %c0_i32_10 = arith.constant 0 : i32
    %13 = arith.cmpi ne, %12, %c0_i32_10 : i32
    scf.if %13 {
      %cst_13 = arith.constant 0.000000e+00 : f32
      %17 = vector.broadcast %cst_13 : f32 to vector<8x1xf32>
      %c0_14 = arith.constant 0 : index
      %c0_15 = arith.constant 0 : index
      %c0_16 = arith.constant 0 : index
      %18 = vector.load %arg6[%c0_14, %c0_15, %c0_16] : memref<1x8x1xf32, #tpu.memory_space<vmem>>, vector<1x8x1xf32>
      %19 = vector.shape_cast %18 : vector<1x8x1xf32> to vector<8x1xf32>
      %20 = vector.shape_cast %17 : vector<8x1xf32> to vector<1x8x1xf32>
      tpu.vector_store %arg6[%c0_14, %c0_15, %c0_16], %20 {strides = array<i32>} : memref<1x8x1xf32, #tpu.memory_space<vmem>>, vector<1x8x1xf32>,
      %cst_17 = arith.constant 0.000000e+00 : f32
      %21 = vector.broadcast %cst_17 : f32 to vector<8x1xf32>
      %c0_18 = arith.constant 0 : index
      %c0_19 = arith.constant 0 : index
      %c0_20 = arith.constant 0 : index
      %22 = vector.load %arg7[%c0_18, %c0_19, %c0_20] : memref<1x8x1xf32, #tpu.memory_space<vmem>>, vector<1x8x1xf32>
      %23 = vector.shape_cast %22 : vector<1x8x1xf32> to vector<8x1xf32>
      %24 = vector.shape_cast %21 : vector<8x1xf32> to vector<1x8x1xf32>
      tpu.vector_store %arg7[%c0_18, %c0_19, %c0_20], %24 {strides = array<i32>} : memref<1x8x1xf32, #tpu.memory_space<vmem>>, vector<1x8x1xf32>,
    } else {
    }
    %c0_i32_11 = arith.constant 0 : i32
    %14 = arith.cmpi eq, %arg2, %c0_i32_11 : i32
    %15 = arith.extui %14 : i1 to i32
    %c0_i32_12 = arith.constant 0 : i32
    %16 = arith.cmpi ne, %15, %c0_i32_12 : i32
    scf.if %16 {
      %c0_13 = arith.constant 0 : index
      %c0_14 = arith.constant 0 : index
      %17 = vector.load %arg5[%c0_13, %c0_14] : memref<8x1024xf32, #tpu.memory_space<vmem>>, vector<8x1024xf32>
      %c0_15 = arith.constant 0 : index
      %c0_16 = arith.constant 0 : index
      %c0_17 = arith.constant 0 : index
      %18 = vector.load %arg6[%c0_15, %c0_16, %c0_17] : memref<1x8x1xf32, #tpu.memory_space<vmem>>, vector<1x8x1xf32>
      %19 = vector.shape_cast %18 : vector<1x8x1xf32> to vector<8x1xf32>
      %cst_18 = arith.constant dense<0.000000e+00> : vector<8xf32>
      %20 = vector.multi_reduction <add>, %17, %cst_18 [1] : vector<8x1024xf32> to vector<8xf32>
      %21 = vector.shape_cast %20 : vector<8xf32> to vector<8x1xf32>
      %22 = arith.addf %19, %21 : vector<8x1xf32>
      %c0_19 = arith.constant 0 : index
      %c0_20 = arith.constant 0 : index
      %c0_21 = arith.constant 0 : index
      %23 = vector.load %arg6[%c0_19, %c0_20, %c0_21] : memref<1x8x1xf32, #tpu.memory_space<vmem>>, vector<1x8x1xf32>
      %24 = vector.shape_cast %23 : vector<1x8x1xf32> to vector<8x1xf32>
      %25 = vector.shape_cast %22 : vector<8x1xf32> to vector<1x8x1xf32>
      tpu.vector_store %arg6[%c0_19, %c0_20, %c0_21], %25 {strides = array<i32>} : memref<1x8x1xf32, #tpu.memory_space<vmem>>, vector<1x8x1xf32>,
      %c0_22 = arith.constant 0 : index
      %c0_23 = arith.constant 0 : index
      %c0_24 = arith.constant 0 : index
      %26 = vector.load %arg7[%c0_22, %c0_23, %c0_24] : memref<1x8x1xf32, #tpu.memory_space<vmem>>, vector<1x8x1xf32>
      %27 = vector.shape_cast %26 : vector<1x8x1xf32> to vector<8x1xf32>
      %28 = arith.mulf %17, %17 : vector<8x1024xf32>
      %cst_25 = arith.constant dense<0.000000e+00> : vector<8xf32>
      %29 = vector.multi_reduction <add>, %28, %cst_25 [1] : vector<8x1024xf32> to vector<8xf32>
      %30 = vector.shape_cast %29 : vector<8xf32> to vector<8x1xf32>
      %31 = arith.addf %27, %30 : vector<8x1xf32>
      %c0_26 = arith.constant 0 : index
      %c0_27 = arith.constant 0 : index
      %c0_28 = arith.constant 0 : index
      %32 = vector.load %arg7[%c0_26, %c0_27, %c0_28] : memref<1x8x1xf32, #tpu.memory_space<vmem>>, vector<1x8x1xf32>
      %33 = vector.shape_cast %32 : vector<1x8x1xf32> to vector<8x1xf32>
      %34 = vector.shape_cast %31 : vector<8x1xf32> to vector<1x8x1xf32>
      tpu.vector_store %arg7[%c0_26, %c0_27, %c0_28], %34 {strides = array<i32>} : memref<1x8x1xf32, #tpu.memory_space<vmem>>, vector<1x8x1xf32>,
    } else {
    }
    return
  }
  func.func @transform_0(%arg0: i32, %arg1: i32, %arg2: i32) -> (i32, i32) {
    %c2_i32 = arith.constant 2 : i32
    %0 = arith.muli %arg0, %c2_i32 : i32
    %1 = arith.addi %0, %arg1 : i32
    %c0_i32 = arith.constant 0 : i32
    return %arg2, %1 : i32, i32
  }
  func.func @transform_1(%arg0: i32, %arg1: i32, %arg2: i32) -> (i32, i32) {
    %c0_i32 = arith.constant 0 : i32
    %c0_i32_0 = arith.constant 0 : i32
    return %c0_i32, %arg2 : i32, i32
  }
  func.func @transform_2(%arg0: i32, %arg1: i32, %arg2: i32) -> (i32, i32) {
    %c2_i32 = arith.constant 2 : i32
    %0 = arith.muli %arg0, %c2_i32 : i32
    %1 = arith.addi %0, %arg1 : i32
    %c0_i32 = arith.constant 0 : i32
    %c0_i32_0 = arith.constant 0 : i32
    return %c0_i32, %1 : i32, i32
  }
  func.func @transform_3(%arg0: i32, %arg1: i32, %arg2: i32) -> (i32, i32, i32) {
    %c0_i32 = arith.constant 0 : i32
    %c0_i32_0 = arith.constant 0 : i32
    %c0_i32_1 = arith.constant 0 : i32
    return %arg0, %c0_i32, %c0_i32_0 : i32, i32, i32
  }
  func.func @transform_4(%arg0: i32, %arg1: i32, %arg2: i32) -> (i32, i32, i32) {
    %c0_i32 = arith.constant 0 : i32
    %c0_i32_0 = arith.constant 0 : i32
    %c0_i32_1 = arith.constant 0 : i32
    return %arg0, %c0_i32, %c0_i32_0 : i32, i32, i32
  }
}

module attributes {stable_mosaic.version = 11 : i64} {
  func.func @_bn_relu_kernel(%arg0: i32, %arg1: memref<8x4096xf32, #tpu.memory_space<vmem>>, %arg2: memref<8x1xf32, #tpu.memory_space<vmem>>, %arg3: memref<8x1xf32, #tpu.memory_space<vmem>>, %arg4: memref<8x4096xf32, #tpu.memory_space<vmem>>) attributes {dimension_semantics = [#tpu.dimension_semantics<parallel>], iteration_bounds = array<i64: 1>, scalar_prefetch = 0 : i64, scratch_operands = 0 : i64, tpu.core_type = #tpu.core_type<tc>, window_params = [{transform_indices = @transform_0, window_bounds = array<i64: 8, 4096>}, {pipeline_mode = #tpu.pipeline_mode<synchronous>, transform_indices = @transform_1, window_bounds = array<i64: 8, 1>}, {pipeline_mode = #tpu.pipeline_mode<synchronous>, transform_indices = @transform_2, window_bounds = array<i64: 8, 1>}, {transform_indices = @transform_3, window_bounds = array<i64: 8, 4096>}]} {
    %c0 = arith.constant 0 : index
    %c0_0 = arith.constant 0 : index
    %0 = vector.load %arg1[%c0, %c0_0] : memref<8x4096xf32, #tpu.memory_space<vmem>>, vector<8x4096xf32>
    %c0_1 = arith.constant 0 : index
    %c0_2 = arith.constant 0 : index
    %1 = vector.load %arg2[%c0_1, %c0_2] : memref<8x1xf32, #tpu.memory_space<vmem>>, vector<8x1xf32>
    %2 = vector.broadcast %1 : vector<8x1xf32> to vector<8x4096xf32>
    %3 = arith.mulf %0, %2 : vector<8x4096xf32>
    %c0_3 = arith.constant 0 : index
    %c0_4 = arith.constant 0 : index
    %4 = vector.load %arg3[%c0_3, %c0_4] : memref<8x1xf32, #tpu.memory_space<vmem>>, vector<8x1xf32>
    %5 = vector.broadcast %4 : vector<8x1xf32> to vector<8x4096xf32>
    %6 = arith.addf %3, %5 : vector<8x4096xf32>
    %cst = arith.constant 0.000000e+00 : f32
    %7 = vector.broadcast %cst : f32 to vector<8x4096xf32>
    %8 = arith.maximumf %6, %7 : vector<8x4096xf32>
    %c0_5 = arith.constant 0 : index
    %c0_6 = arith.constant 0 : index
    %9 = vector.load %arg4[%c0_5, %c0_6] : memref<8x4096xf32, #tpu.memory_space<vmem>>, vector<8x4096xf32>
    tpu.vector_store %arg4[%c0_5, %c0_6], %8 {strides = array<i32>} : memref<8x4096xf32, #tpu.memory_space<vmem>>, vector<8x4096xf32>,
    return
  }
  func.func @transform_0(%arg0: i32) -> (i32, i32) {
    %c0_i32 = arith.constant 0 : i32
    %c0_i32_0 = arith.constant 0 : i32
    return %c0_i32, %arg0 : i32, i32
  }
  func.func @transform_1(%arg0: i32) -> (i32, i32) {
    %c0_i32 = arith.constant 0 : i32
    %c0_i32_0 = arith.constant 0 : i32
    %c0_i32_1 = arith.constant 0 : i32
    return %c0_i32, %c0_i32_0 : i32, i32
  }
  func.func @transform_2(%arg0: i32) -> (i32, i32) {
    %c0_i32 = arith.constant 0 : i32
    %c0_i32_0 = arith.constant 0 : i32
    %c0_i32_1 = arith.constant 0 : i32
    return %c0_i32, %c0_i32_0 : i32, i32
  }
  func.func @transform_3(%arg0: i32) -> (i32, i32) {
    %c0_i32 = arith.constant 0 : i32
    %c0_i32_0 = arith.constant 0 : i32
    return %c0_i32, %arg0 : i32, i32
  }
}

</mosaic_0001>

<llo_original>
// kernel: conv_block_forward.3
$region0: #{conv_block_forward.3}
  #allocation0 [shape = 'u32[]', space=smem, size = 0x4, offset = 0x4, fixed_abs, tag = 'smem constant byte address 0x4 - core index']
  #allocation1 [shape = 'u32[144,128]{1,0:T(1,128)}', space=vmem, size = 0x12000, scoped, tag = 'internal scratch']
  %s0 = inlined_call_operand.vmem [shape: f32[8,4096], index: 0, kind: input, shape index: {}, may-alias: {0,3}]
  %s1 = inlined_call_operand.vmem [shape: f32[8,1], index: 1, kind: input, shape index: {}]
  %s2 = inlined_call_operand.vmem [shape: f32[8,1], index: 2, kind: input, shape index: {}]
  %s3 = inlined_call_operand.vmem [shape: f32[8,4096], index: 3, kind: output, shape index: {}, may-alias: {0,3}]
  %s4 = sld [smem:[#allocation0]]
  $region22: #{conv_block_forward.3} parent=0
    _
  %s6 = ssub.s32 1, %s4
  %s7 = scalar_select 0, %s6, %s4
  // Predicated region
  $region2: #{conv_block_forward.3} parent=0 // pred_check
    _
  $region3: #{conv_block_forward.3} parent=0 // pred_check_branch
    %9 = sbr.rel (0) target = $region5
  $region4: #{conv_block_forward.3} parent=0 // pred_region
    _
  $region5: #{conv_block_forward.3} parent=0 // pred_fallthru
    _
  // Predicated region
  $region6: #{conv_block_forward.3} parent=0 // pred_check
    _
  $region7: #{conv_block_forward.3} parent=0 // pred_check_branch
    %11 = sbr.rel (0) target = $region9
  $region8: #{conv_block_forward.3} parent=0 // pred_region
    _
  $region9: #{conv_block_forward.3} parent=0 // pred_fallthru
    _
  // Predicated region
  $region10: #{conv_block_forward.3} parent=0 // pred_check
    _
  $region11: #{conv_block_forward.3} parent=0 // pred_check_branch
    %13 = sbr.rel (0) target = $region13
  $region12: #{conv_block_forward.3} parent=0 // pred_region
    _
  $region13: #{conv_block_forward.3} parent=0 // pred_fallthru
    _
  %v14 = vld [vmem:[%s0] sm:$0xff]
  %v15 = vld [vmem:[%s0 + $0x8] sm:$0xff]
  %v16 = vld [vmem:[%s0 + $0x10] sm:$0xff]
  %v17 = vld [vmem:[%s0 + $0x18] sm:$0xff]
  %v18 = vld [vmem:[%s0 + $0x20] sm:$0xff]
  %v19 = vld [vmem:[%s0 + $0x28] sm:$0xff]
  %v20 = vld [vmem:[%s0 + $0x30] sm:$0xff]
  %v21 = vld [vmem:[%s0 + $0x38] sm:$0xff]
  %v22 = vld [vmem:[%s0 + $0x40] sm:$0xff]
  %v23 = vld [vmem:[%s0 + $0x48] sm:$0xff]
  %v24 = vld [vmem:[%s0 + $0x50] sm:$0xff]
  %v25 = vld [vmem:[%s0 + $0x58] sm:$0xff]
  %v26 = vld [vmem:[%s0 + $0x60] sm:$0xff]
  %v27 = vld [vmem:[%s0 + $0x68] sm:$0xff]
  %v28 = vld [vmem:[%s0 + $0x70] sm:$0xff]
  %v29 = vld [vmem:[%s0 + $0x78] sm:$0xff]
  %v30 = vld [vmem:[%s0 + $0x80] sm:$0xff]
  %v31 = vld [vmem:[%s0 + $0x88] sm:$0xff]
  %v32 = vld [vmem:[%s0 + $0x90] sm:$0xff]
  %v33 = vld [vmem:[%s0 + $0x98] sm:$0xff]
  %v34 = vld [vmem:[%s0 + $0xa0] sm:$0xff]
  %v35 = vld [vmem:[%s0 + $0xa8] sm:$0xff]
  %v36 = vld [vmem:[%s0 + $0xb0] sm:$0xff]
  %v37 = vld [vmem:[%s0 + $0xb8] sm:$0xff]
  %v38 = vld [vmem:[%s0 + $0xc0] sm:$0xff]
  %v39 = vld [vmem:[%s0 + $0xc8] sm:$0xff]
  %v40 = vld [vmem:[%s0 + $0xd0] sm:$0xff]
  %v41 = vld [vmem:[%s0 + $0xd8] sm:$0xff]
  %v42 = vld [vmem:[%s0 + $0xe0] sm:$0xff]
  %v43 = vld [vmem:[%s0 + $0xe8] sm:$0xff]
  %v44 = vld [vmem:[%s0 + $0xf0] sm:$0xff]
  %v45 = vld [vmem:[%s0 + $0xf8] sm:$0xff]
  %v46 = vld [vmem:[%s1] sm:$0xff]
  %48 = vset.pattern.permute.xlu0 0
  %49 = vperm.xlu0 %48, %v46
  %v50 = vpop.permute.xlu0 %49
  %v52 = vmul.f32 %v14, %v50
  %v53 = vmul.f32 %v15, %v50
  %v54 = vmul.f32 %v16, %v50
  %v55 = vmul.f32 %v17, %v50
  %v56 = vmul.f32 %v18, %v50
  %v57 = vmul.f32 %v19, %v50
  %v58 = vmul.f32 %v20, %v50
  %v59 = vmul.f32 %v21, %v50
  %v60 = vmul.f32 %v22, %v50
  %v61 = vmul.f32 %v23, %v50
  %v62 = vmul.f32 %v24, %v50
  %v63 = vmul.f32 %v25, %v50
  %v64 = vmul.f32 %v26, %v50
  %v65 = vmul.f32 %v27, %v50
  %v66 = vmul.f32 %v28, %v50
  %v67 = vmul.f32 %v29, %v50
  %v68 = vmul.f32 %v30, %v50
  %v69 = vmul.f32 %v31, %v50
  %v70 = vmul.f32 %v32, %v50
  %v71 = vmul.f32 %v33, %v50
  %v72 = vmul.f32 %v34, %v50
  %v73 = vmul.f32 %v35, %v50
  %v74 = vmul.f32 %v36, %v50
  %v75 = vmul.f32 %v37, %v50
  %v76 = vmul.f32 %v38, %v50
  %v77 = vmul.f32 %v39, %v50
  %v78 = vmul.f32 %v40, %v50
  %v79 = vmul.f32 %v41, %v50
  %v80 = vmul.f32 %v42, %v50
  %v81 = vmul.f32 %v43, %v50
  %v82 = vmul.f32 %v44, %v50
  %v83 = vmul.f32 %v45, %v50
  %v84 = vld [vmem:[%s2] sm:$0xff]
  %86 = vset.pattern.permute.xlu0 0
  %87 = vperm.xlu0 %86, %v84
  %v88 = vpop.permute.xlu0 %87
  %v90 = vadd.f32 %v52, %v88
  %v91 = vadd.f32 %v53, %v88
  %v92 = vadd.f32 %v54, %v88
  %v93 = vadd.f32 %v55, %v88
  %v94 = vadd.f32 %v56, %v88
  %v95 = vadd.f32 %v57, %v88
  %v96 = vadd.f32 %v58, %v88
  %v97 = vadd.f32 %v59, %v88
  %v98 = vadd.f32 %v60, %v88
  %v99 = vadd.f32 %v61, %v88
  %v100 = vadd.f32 %v62, %v88
  %v101 = vadd.f32 %v63, %v88
  %v102 = vadd.f32 %v64, %v88
  %v103 = vadd.f32 %v65, %v88
  %v104 = vadd.f32 %v66, %v88
  %v105 = vadd.f32 %v67, %v88
  %v106 = vadd.f32 %v68, %v88
  %v107 = vadd.f32 %v69, %v88
  %v108 = vadd.f32 %v70, %v88
  %v109 = vadd.f32 %v71, %v88
  %v110 = vadd.f32 %v72, %v88
  %v111 = vadd.f32 %v73, %v88
  %v112 = vadd.f32 %v74, %v88
  %v113 = vadd.f32 %v75, %v88
  %v114 = vadd.f32 %v76, %v88
  %v115 = vadd.f32 %v77, %v88
  %v116 = vadd.f32 %v78, %v88
  %v117 = vadd.f32 %v79, %v88
  %v118 = vadd.f32 %v80, %v88
  %v119 = vadd.f32 %v81, %v88
  %v120 = vadd.f32 %v82, %v88
  %v121 = vadd.f32 %v83, %v88
  %v122 = vmax.f32 %v90, 0.0
  %v123 = vmax.f32 %v91, 0.0
  %v124 = vmax.f32 %v92, 0.0
  %v125 = vmax.f32 %v93, 0.0
  %v126 = vmax.f32 %v94, 0.0
  %v127 = vmax.f32 %v95, 0.0
  %v128 = vmax.f32 %v96, 0.0
  %v129 = vmax.f32 %v97, 0.0
  %v130 = vmax.f32 %v98, 0.0
  %v131 = vmax.f32 %v99, 0.0
  %v132 = vmax.f32 %v100, 0.0
  %v133 = vmax.f32 %v101, 0.0
  %v134 = vmax.f32 %v102, 0.0
  %v135 = vmax.f32 %v103, 0.0
  %v136 = vmax.f32 %v104, 0.0
  %v137 = vmax.f32 %v105, 0.0
  %v138 = vmax.f32 %v106, 0.0
  %v139 = vmax.f32 %v107, 0.0
  %v140 = vmax.f32 %v108, 0.0
  %v141 = vmax.f32 %v109, 0.0
  %v142 = vmax.f32 %v110, 0.0
  %v143 = vmax.f32 %v111, 0.0
  %v144 = vmax.f32 %v112, 0.0
  %v145 = vmax.f32 %v113, 0.0
  %v146 = vmax.f32 %v114, 0.0
  %v147 = vmax.f32 %v115, 0.0
  %v148 = vmax.f32 %v116, 0.0
  %v149 = vmax.f32 %v117, 0.0
  %v150 = vmax.f32 %v118, 0.0
  %v151 = vmax.f32 %v119, 0.0
  %v152 = vmax.f32 %v120, 0.0
  %v153 = vmax.f32 %v121, 0.0
  %154 = vst [vmem:[%s3] sm:$0xff] %v122
  %155 = vst [vmem:[%s3 + $0x8] sm:$0xff] %v123
  %156 = vst [vmem:[%s3 + $0x10] sm:$0xff] %v124
  %157 = vst [vmem:[%s3 + $0x18] sm:$0xff] %v125
  %158 = vst [vmem:[%s3 + $0x20] sm:$0xff] %v126
  %159 = vst [vmem:[%s3 + $0x28] sm:$0xff] %v127
  %160 = vst [vmem:[%s3 + $0x30] sm:$0xff] %v128
  %161 = vst [vmem:[%s3 + $0x38] sm:$0xff] %v129
  %162 = vst [vmem:[%s3 + $0x40] sm:$0xff] %v130
  %163 = vst [vmem:[%s3 + $0x48] sm:$0xff] %v131
  %164 = vst [vmem:[%s3 + $0x50] sm:$0xff] %v132
  %165 = vst [vmem:[%s3 + $0x58] sm:$0xff] %v133
  %166 = vst [vmem:[%s3 + $0x60] sm:$0xff] %v134
  %167 = vst [vmem:[%s3 + $0x68] sm:$0xff] %v135
  %168 = vst [vmem:[%s3 + $0x70] sm:$0xff] %v136
  %169 = vst [vmem:[%s3 + $0x78] sm:$0xff] %v137
  %170 = vst [vmem:[%s3 + $0x80] sm:$0xff] %v138
  %171 = vst [vmem:[%s3 + $0x88] sm:$0xff] %v139
  %172 = vst [vmem:[%s3 + $0x90] sm:$0xff] %v140
  %173 = vst [vmem:[%s3 + $0x98] sm:$0xff] %v141
  %174 = vst [vmem:[%s3 + $0xa0] sm:$0xff] %v142
  %175 = vst [vmem:[%s3 + $0xa8] sm:$0xff] %v143
  %176 = vst [vmem:[%s3 + $0xb0] sm:$0xff] %v144
  %177 = vst [vmem:[%s3 + $0xb8] sm:$0xff] %v145
  %178 = vst [vmem:[%s3 + $0xc0] sm:$0xff] %v146
  %179 = vst [vmem:[%s3 + $0xc8] sm:$0xff] %v147
  %180 = vst [vmem:[%s3 + $0xd0] sm:$0xff] %v148
  %181 = vst [vmem:[%s3 + $0xd8] sm:$0xff] %v149
  %182 = vst [vmem:[%s3 + $0xe0] sm:$0xff] %v150
  %183 = vst [vmem:[%s3 + $0xe8] sm:$0xff] %v151
  %184 = vst [vmem:[%s3 + $0xf0] sm:$0xff] %v152
  %185 = vst [vmem:[%s3 + $0xf8] sm:$0xff] %v153
  // Predicated region
  $region14: #{conv_block_forward.3} parent=0 // pred_check
    _
  $region15: #{conv_block_forward.3} parent=0 // pred_check_branch
    %187 = sbr.rel (0) target = $region17
  $region16: #{conv_block_forward.3} parent=0 // pred_region
    _
  $region17: #{conv_block_forward.3} parent=0 // pred_fallthru
    _
  // Predicated region
  $region18: #{conv_block_forward.3} parent=0 // pred_check
    _
  $region19: #{conv_block_forward.3} parent=0 // pred_check_branch
    %189 = sbr.rel (0) target = $region21
  $region20: #{conv_block_forward.3} parent=0 // pred_region
    _
  $region21: #{conv_block_forward.3} parent=0 // pred_fallthru
    _

// kernel: conv_block_forward.2
$region0: #{conv_block_forward.2}
  #allocation0 [shape = 'u32[]', space=smem, size = 0x4, offset = 0x4, fixed_abs, tag = 'smem constant byte address 0x4 - core index']
  #allocation1 [shape = 'u32[144,128]{1,0:T(1,128)}', space=vmem, size = 0x12000, scoped, tag = 'internal scratch']
  %s0 = inlined_call_operand.vmem [shape: f32[128,4096], index: 0, kind: input, shape index: {}]
  %s1 = inlined_call_operand.vmem [shape: f32[8,128], index: 1, kind: input, shape index: {}]
  %s2 = inlined_call_operand.vmem [shape: f32[8,4096], index: 2, kind: output, shape index: {0}]
  %s3 = inlined_call_operand.vmem [shape: f32[2,8,1], index: 3, kind: output, shape index: {1}]
  %s4 = inlined_call_operand.vmem [shape: f32[2,8,1], index: 4, kind: output, shape index: {2}]
  %5 = xla_tuple %s2, %s3, %s4
  %s6 = sld [smem:[#allocation0]]
  $region92: #{conv_block_forward.2} parent=0
    _
  %s8 = ssub.s32 1, %s6
  %s9 = scalar_select 0, %s8, %s6
  $region1: #{conv_block_forward.2} parent=0
    #allocation2 [shape = 'u8[1048576]{0}', space=vmem, size = 0x100000, scoped, tag = 'input window, operand 0']
    loop: start=0, step=1, limit=6
    $region2: #{conv_block_forward.2} parent=1 // loop_pre_header
      _
    $region3: #{conv_block_forward.2} parent=1 // loop_header
      %s11 = sphi 0, %s15
      %p12 = scmp.ge.s32.totalorder %s11, 6
      %s18 = sphi 0, %s37
      %s19 = sphi 0, %s33
      %s20 = sphi 0, %s29
      %s21 = sphi 0, %s18
      %s22 = sphi 0, %s19
      %s23 = sphi 0, %s20
      %s24 = sphi 0, %s21
      %s25 = sphi 0, %s22
      %s26 = sphi 0, %s23
      %s46 = sphi 0, %s48
      %s49 = sphi 0, %s46
      %s50 = sphi 0, %s49
      %s66 = sphi 0, %s50
      %s72 = sphi 0, %s74
      %s75 = sphi 0, %s72
      %s76 = sphi 0, %s75
      %s92 = sphi 0, %s76
      %s102 = sphi 0, %s104
      %s105 = sphi 0, %s102
      %s106 = sphi 0, %s105
      %s122 = sphi 0, %s106
      %s128 = sphi 0, %s130
      %s131 = sphi 0, %s128
      %s132 = sphi 0, %s131
      %s148 = sphi 0, %s132
      %s154 = sphi 0, %s156
      %s157 = sphi 0, %s154
      %s158 = sphi 0, %s157
      %s174 = sphi 0, %s158
    $region4: #{conv_block_forward.2} parent=1 // loop_header_branch
      %14 = sbr.rel (%p12) target = $region8
    $region5: #{conv_block_forward.2} parent=1 // loop_body
      %s16 = ssub.s32 %s11, 1
      %s17 = ssub.s32 %s11, 2
      %s27 = sadd.s32 1, %s20
      %p28 = scmp.ge.s32.totalorder %s27, 1
      %s29 = scalar_select %p28, 0, %s27
      %s30 = sadd.s32 1, %s19
      %s31 = scalar_select %p28, %s30, %s19
      %p32 = scmp.ge.s32.totalorder %s31, 2
      %s33 = scalar_select %p32, 0, %s31
      %s34 = sadd.s32 1, %s18
      %s35 = scalar_select %p32, %s34, %s18
      %p36 = scmp.ge.s32.totalorder %s35, 2
      %s37 = scalar_select %p36, 0, %s35
      %s38 = smul.u32 %s18, 2
      %s39 = sadd.s32 %s38, %s19
      %s40 = smul.u32 %s37, 2
      %s41 = sadd.s32 %s40, %s33
      %s42 = ssub.s32 %s20, %s29
      %s43 = ssub.s32 %s39, %s41
      %s44 = sor.u32 %s42, %s43
      %p45 = scmp.eq.s32.totalorder %s44, 0
      %s47 = sadd.s32 %s46, 1
      %s48 = scalar_select %p45, %s46, %s47
      %p51 = pneg %p45
      %p52 = scmp.eq.s32.totalorder %s11, 3
      %p53 = por %p51, %p52
      %p54 = scmp.ne.s32.totalorder %s46, %s49
      %p55 = scmp.eq.s32.totalorder %s11, 0
      %p56 = por %p54, %p55
      %p57 = scmp.ne.s32.totalorder %s46, %s49
      %p58 = scmp.eq.s32.totalorder %s16, 3
      %p59 = por %p57, %p58
      %p60 = scmp.ne.s32.totalorder %s49, %s50
      %p61 = scmp.eq.s32.totalorder %s16, 0
      %p62 = por %p60, %p61
      %p63 = scmp.ne.s32.totalorder %s49, %s50
      %p64 = scmp.eq.s32.totalorder %s17, 3
      %p65 = por %p63, %p64
      %p67 = scmp.ne.s32.totalorder %s50, %s66
      %p68 = scmp.eq.s32.totalorder %s17, 0
      %p69 = por %p67, %p68
      %s70 = ssub.s32 %s20, %s29
      %p71 = scmp.eq.s32.totalorder %s70, 0
      %s73 = sadd.s32 %s72, 1
      %s74 = scalar_select %p71, %s72, %s73
      %p77 = pneg %p71
      %p78 = scmp.eq.s32.totalorder %s11, 3
      %p79 = por %p77, %p78
      %p80 = scmp.ne.s32.totalorder %s72, %s75
      %p81 = scmp.eq.s32.totalorder %s11, 0
      %p82 = por %p80, %p81
      %p83 = scmp.ne.s32.totalorder %s72, %s75
      %p84 = scmp.eq.s32.totalorder %s16, 3
      %p85 = por %p83, %p84
      %p86 = scmp.ne.s32.totalorder %s75, %s76
      %p87 = scmp.eq.s32.totalorder %s16, 0
      %p88 = por %p86, %p87
      %p89 = scmp.ne.s32.totalorder %s75, %s76
      %p90 = scmp.eq.s32.totalorder %s17, 3
      %p91 = por %p89, %p90
      %p93 = scmp.ne.s32.totalorder %s76, %s92
      %p94 = scmp.eq.s32.totalorder %s17, 0
      %p95 = por %p93, %p94
      %s96 = smul.u32 %s18, 2
      %s97 = sadd.s32 %s96, %s19
      %s98 = smul.u32 %s37, 2
      %s99 = sadd.s32 %s98, %s33
      %s100 = ssub.s32 %s97, %s99
      %p101 = scmp.eq.s32.totalorder %s100, 0
      %s103 = sadd.s32 %s102, 1
      %s104 = scalar_select %p101, %s102, %s103
      %p107 = pneg %p101
      %p108 = scmp.eq.s32.totalorder %s11, 3
      %p109 = por %p107, %p108
      %p110 = scmp.ne.s32.totalorder %s102, %s105
      %p111 = scmp.eq.s32.totalorder %s11, 0
      %p112 = por %p110, %p111
      %p113 = scmp.ne.s32.totalorder %s102, %s105
      %p114 = scmp.eq.s32.totalorder %s16, 3
      %p115 = por %p113, %p114
      %p116 = scmp.ne.s32.totalorder %s105, %s106
      %p117 = scmp.eq.s32.totalorder %s16, 0
      %p118 = por %p116, %p117
      %p119 = scmp.ne.s32.totalorder %s105, %s106
      %p120 = scmp.eq.s32.totalorder %s17, 3
      %p121 = por %p119, %p120
      %p123 = scmp.ne.s32.totalorder %s106, %s122
      %p124 = scmp.eq.s32.totalorder %s17, 0
      %p125 = por %p123, %p124
      %s126 = ssub.s32 %s18, %s37
      %p127 = scmp.eq.s32.totalorder %s126, 0
      %s129 = sadd.s32 %s128, 1
      %s130 = scalar_select %p127, %s128, %s129
      %p133 = pneg %p127
      %p134 = scmp.eq.s32.totalorder %s11, 3
      %p135 = por %p133, %p134
      %p136 = scmp.ne.s32.totalorder %s128, %s131
      %p137 = scmp.eq.s32.totalorder %s11, 0
      %p138 = por %p136, %p137
      %p139 = scmp.ne.s32.totalorder %s128, %s131
      %p140 = scmp.eq.s32.totalorder %s16, 3
      %p141 = por %p139, %p140
      %p142 = scmp.ne.s32.totalorder %s131, %s132
      %p143 = scmp.eq.s32.totalorder %s16, 0
      %p144 = por %p142, %p143
      %p145 = scmp.ne.s32.totalorder %s131, %s132
      %p146 = scmp.eq.s32.totalorder %s17, 3
      %p147 = por %p145, %p146
      %p149 = scmp.ne.s32.totalorder %s132, %s148
      %p150 = scmp.eq.s32.totalorder %s17, 0
      %p151 = por %p149, %p150
      %s152 = ssub.s32 %s18, %s37
      %p153 = scmp.eq.s32.totalorder %s152, 0
      %s155 = sadd.s32 %s154, 1
      %s156 = scalar_select %p153, %s154, %s155
      %p159 = pneg %p153
      %p160 = scmp.eq.s32.totalorder %s11, 3
      %p161 = por %p159, %p160
      %p162 = scmp.ne.s32.totalorder %s154, %s157
      %p163 = scmp.eq.s32.totalorder %s11, 0
      %p164 = por %p162, %p163
      %p165 = scmp.ne.s32.totalorder %s154, %s157
      %p166 = scmp.eq.s32.totalorder %s16, 3
      %p167 = por %p165, %p166
      %p168 = scmp.ne.s32.totalorder %s157, %s158
      %p169 = scmp.eq.s32.totalorder %s16, 0
      %p170 = por %p168, %p169
      %p171 = scmp.ne.s32.totalorder %s157, %s158
      %p172 = scmp.eq.s32.totalorder %s17, 3
      %p173 = por %p171, %p172
      %p175 = scmp.ne.s32.totalorder %s158, %s174
      %p176 = scmp.eq.s32.totalorder %s17, 0
      %p177 = por %p175, %p176
      %p178 = scmp.le.s32.totalorder 1, %s11
      %p179 = scmp.lt.s32.totalorder %s11, 5
      %p180 = pnand %p178, %p179
      %p181 = pneg %p180
      // Predicated region
      $region9: #{conv_block_forward.2} parent=5 // pred_check
        _
      $region10: #{conv_block_forward.2} parent=5 // pred_check_branch
        %183 = sbr.rel (%p180) target = $region12
      $region11: #{conv_block_forward.2} parent=5 // pred_region
        %s184 = ssub.s32 %s11, 1
        // Predicated region
        $region13: #{conv_block_forward.2} parent=11 // pred_check
          %p185 = pneg %p88
        $region14: #{conv_block_forward.2} parent=11 // pred_check_branch
          %187 = sbr.rel (%p185) target = $region16
        $region15: #{conv_block_forward.2} parent=11 // pred_region
          %p188 = scmp.lt.s32.totalorder %s23, 0
          %s189 = scalar_select %p188, %s23, 0
          %s190 = smul.addr %s189, 8
          %s191 = scalar_lea.vmem %s1, %s190
        $region16: #{conv_block_forward.2} parent=11 // pred_fallthru
          _
      $region12: #{conv_block_forward.2} parent=5 // pred_fallthru
        _
      %p192 = scmp.lt.s32.totalorder %s11, 4
      // Predicated region
      $region17: #{conv_block_forward.2} parent=5 // pred_check
        %p193 = pneg %p192
      $region18: #{conv_block_forward.2} parent=5 // pred_check_branch
        %195 = sbr.rel (%p193) target = $region20
      $region19: #{conv_block_forward.2} parent=5 // pred_region
        // Predicated region
        $region21: #{conv_block_forward.2} parent=19 // pred_check
          %p196 = pneg %p56
        $region22: #{conv_block_forward.2} parent=19 // pred_check_branch
          %198 = sbr.rel (%p196) target = $region24
        $region23: #{conv_block_forward.2} parent=19 // pred_region
          %s199 = sand.u32 %s46, 1
          %s200 = sand.u32 %s46, 1
          %s201 = smul.addr %s200, 1024
          %s202 = scalar_lea.vmem [#allocation2], %s201
          %s203 = smul.u32 %s18, 2
          %s204 = sadd.s32 %s203, %s19
          %s205 = smul.u32 16, %s20
          %s206 = smul.u32 8, %s204
          %s207 = smul.addr %s205, 32
          %s208 = sadd.s32 %s206, %s207
          %s209 = smul.addr %s208, 8
          %s210 = scalar_lea.vmem %s0, %s209
          // Predicated region
          $region25: #{conv_block_forward.2} parent=23 // pred_check
            _
          $region26: #{conv_block_forward.2} parent=23 // pred_check_branch
            %212 = sbr.rel (0) target = $region28
          $region27: #{conv_block_forward.2} parent=23 // pred_region
            // Predicated region
            $region29: #{conv_block_forward.2} parent=27 // pred_check
              _
            $region30: #{conv_block_forward.2} parent=27 // pred_check_branch
              %214 = sbr.rel (0) target = $region32
            $region31: #{conv_block_forward.2} parent=27 // pred_region
              loop: start=0, step=1, limit=1
              $region33: #{conv_block_forward.2} parent=31 // loop_pre_header
                _
              $region34: #{conv_block_forward.2} parent=31 // loop_header
                %s216 = sphi 0, %s220
                %p217 = scmp.ge.s32.totalorder %s216, 1
                %s221 = sphi %s210, %s210
                %s222 = sphi %s202, %s202
              $region35: #{conv_block_forward.2} parent=31 // loop_header_branch
                %219 = sbr.rel (%p217) target = $region39
              $region36: #{conv_block_forward.2} parent=31 // loop_body
                %v223 = vld [vmem:[%s221] sm:$0xff]
                %224 = vst [vmem:[%s222] sm:$0xff] %v223
                %v225 = vld [vmem:[%s221 + $0x8] sm:$0xff]
                %226 = vst [vmem:[%s222 + $0x8] sm:$0xff] %v225
                %v227 = vld [vmem:[%s221 + $0x10] sm:$0xff]
                %228 = vst [vmem:[%s222 + $0x10] sm:$0xff] %v227
                %v229 = vld [vmem:[%s221 + $0x18] sm:$0xff]
                %230 = vst [vmem:[%s222 + $0x18] sm:$0xff] %v229
                %v231 = vld [vmem:[%s221 + $0x20] sm:$0xff]
                %232 = vst [vmem:[%s222 + $0x20] sm:$0xff] %v231
                %v233 = vld [vmem:[%s221 + $0x28] sm:$0xff]
                %234 = vst [vmem:[%s222 + $0x28] sm:$0xff] %v233
                %v235 = vld [vmem:[%s221 + $0x30] sm:$0xff]
                %236 = vst [vmem:[%s222 + $0x30] sm:$0xff] %v235
                %v237 = vld [vmem:[%s221 + $0x38] sm:$0xff]
                %238 = vst [vmem:[%s222 + $0x38] sm:$0xff] %v237
                %v239 = vld [vmem:[%s221 + $0x100] sm:$0xff]
                %240 = vst [vmem:[%s222 + $0x40] sm:$0xff] %v239
                %v241 = vld [vmem:[%s221 + $0x108] sm:$0xff]
                %242 = vst [vmem:[%s222 + $0x48] sm:$0xff] %v241
                %v243 = vld [vmem:[%s221 + $0x110] sm:$0xff]
                %244 = vst [vmem:[%s222 + $0x50] sm:$0xff] %v243
                %v245 = vld [vmem:[%s221 + $0x118] sm:$0xff]
                %246 = vst [vmem:[%s222 + $0x58] sm:$0xff] %v245
                %v247 = vld [vmem:[%s221 + $0x120] sm:$0xff]
                %248 = vst [vmem:[%s222 + $0x60] sm:$0xff] %v247
                %v249 = vld [vmem:[%s221 + $0x128] sm:$0xff]
                %250 = vst [vmem:[%s222 + $0x68] sm:$0xff] %v249
                %v251 = vld [vmem:[%s221 + $0x130] sm:$0xff]
                %252 = vst [vmem:[%s222 + $0x70] sm:$0xff] %v251
                %v253 = vld [vmem:[%s221 + $0x138] sm:$0xff]
                %254 = vst [vmem:[%s222 + $0x78] sm:$0xff] %v253
                %v255 = vld [vmem:[%s221 + $0x200] sm:$0xff]
                %256 = vst [vmem:[%s222 + $0x80] sm:$0xff] %v255
                %v257 = vld [vmem:[%s221 + $0x208] sm:$0xff]
                %258 = vst [vmem:[%s222 + $0x88] sm:$0xff] %v257
                %v259 = vld [vmem:[%s221 + $0x210] sm:$0xff]
                %260 = vst [vmem:[%s222 + $0x90] sm:$0xff] %v259
                %v261 = vld [vmem:[%s221 + $0x218] sm:$0xff]
                %262 = vst [vmem:[%s222 + $0x98] sm:$0xff] %v261
                %v263 = vld [vmem:[%s221 + $0x220] sm:$0xff]
                %264 = vst [vmem:[%s222 + $0xa0] sm:$0xff] %v263
                %v265 = vld [vmem:[%s221 + $0x228] sm:$0xff]
                %266 = vst [vmem:[%s222 + $0xa8] sm:$0xff] %v265
                %v267 = vld [vmem:[%s221 + $0x230] sm:$0xff]
                %268 = vst [vmem:[%s222 + $0xb0] sm:$0xff] %v267
                %v269 = vld [vmem:[%s221 + $0x238] sm:$0xff]
                %270 = vst [vmem:[%s222 + $0xb8] sm:$0xff] %v269
                %v271 = vld [vmem:[%s221 + $0x300] sm:$0xff]
                %272 = vst [vmem:[%s222 + $0xc0] sm:$0xff] %v271
                %v273 = vld [vmem:[%s221 + $0x308] sm:$0xff]
                %274 = vst [vmem:[%s222 + $0xc8] sm:$0xff] %v273
                %v275 = vld [vmem:[%s221 + $0x310] sm:$0xff]
                %276 = vst [vmem:[%s222 + $0xd0] sm:$0xff] %v275
                %v277 = vld [vmem:[%s221 + $0x318] sm:$0xff]
                %278 = vst [vmem:[%s222 + $0xd8] sm:$0xff] %v277
                %v279 = vld [vmem:[%s221 + $0x320] sm:$0xff]
                %280 = vst [vmem:[%s222 + $0xe0] sm:$0xff] %v279
                %v281 = vld [vmem:[%s221 + $0x328] sm:$0xff]
                %282 = vst [vmem:[%s222 + $0xe8] sm:$0xff] %v281
                %v283 = vld [vmem:[%s221 + $0x330] sm:$0xff]
                %284 = vst [vmem:[%s222 + $0xf0] sm:$0xff] %v283
                %v285 = vld [vmem:[%s221 + $0x338] sm:$0xff]
                %286 = vst [vmem:[%s222 + $0xf8] sm:$0xff] %v285
                %v287 = vld [vmem:[%s221 + $0x400] sm:$0xff]
                %288 = vst [vmem:[%s222 + $0x100] sm:$0xff] %v287
                %v289 = vld [vmem:[%s221 + $0x408] sm:$0xff]
                %290 = vst [vmem:[%s222 + $0x108] sm:$0xff] %v289
                %v291 = vld [vmem:[%s221 + $0x410] sm:$0xff]
                %292 = vst [vmem:[%s222 + $0x110] sm:$0xff] %v291
                %v293 = vld [vmem:[%s221 + $0x418] sm:$0xff]
                %294 = vst [vmem:[%s222 + $0x118] sm:$0xff] %v293
                %v295 = vld [vmem:[%s221 + $0x420] sm:$0xff]
                %296 = vst [vmem:[%s222 + $0x120] sm:$0xff] %v295
                %v297 = vld [vmem:[%s221 + $0x428] sm:$0xff]
                %298 = vst [vmem:[%s222 + $0x128] sm:$0xff] %v297
                %v299 = vld [vmem:[%s221 + $0x430] sm:$0xff]
                %300 = vst [vmem:[%s222 + $0x130] sm:$0xff] %v299
                %v301 = vld [vmem:[%s221 + $0x438] sm:$0xff]
                %302 = vst [vmem:[%s222 + $0x138] sm:$0xff] %v301
                %v303 = vld [vmem:[%s221 + $0x500] sm:$0xff]
                %304 = vst [vmem:[%s222 + $0x140] sm:$0xff] %v303
                %v305 = vld [vmem:[%s221 + $0x508] sm:$0xff]
                %306 = vst [vmem:[%s222 + $0x148] sm:$0xff] %v305
                %v307 = vld [vmem:[%s221 + $0x510] sm:$0xff]
                %308 = vst [vmem:[%s222 + $0x150] sm:$0xff] %v307
                %v309 = vld [vmem:[%s221 + $0x518] sm:$0xff]
                %310 = vst [vmem:[%s222 + $0x158] sm:$0xff] %v309
                %v311 = vld [vmem:[%s221 + $0x520] sm:$0xff]
                %312 = vst [vmem:[%s222 + $0x160] sm:$0xff] %v311
                %v313 = vld [vmem:[%s221 + $0x528] sm:$0xff]
                %314 = vst [vmem:[%s222 + $0x168] sm:$0xff] %v313
                %v315 = vld [vmem:[%s221 + $0x530] sm:$0xff]
                %316 = vst [vmem:[%s222 + $0x170] sm:$0xff] %v315
                %v317 = vld [vmem:[%s221 + $0x538] sm:$0xff]
                %318 = vst [vmem:[%s222 + $0x178] sm:$0xff] %v317
                %v319 = vld [vmem:[%s221 + $0x600] sm:$0xff]
                %320 = vst [vmem:[%s222 + $0x180] sm:$0xff] %v319
                %v321 = vld [vmem:[%s221 + $0x608] sm:$0xff]
                %322 = vst [vmem:[%s222 + $0x188] sm:$0xff] %v321
                %v323 = vld [vmem:[%s221 + $0x610] sm:$0xff]
                %324 = vst [vmem:[%s222 + $0x190] sm:$0xff] %v323
                %v325 = vld [vmem:[%s221 + $0x618] sm:$0xff]
                %326 = vst [vmem:[%s222 + $0x198] sm:$0xff] %v325
                %v327 = vld [vmem:[%s221 + $0x620] sm:$0xff]
                %328 = vst [vmem:[%s222 + $0x1a0] sm:$0xff] %v327
                %v329 = vld [vmem:[%s221 + $0x628] sm:$0xff]
                %330 = vst [vmem:[%s222 + $0x1a8] sm:$0xff] %v329
                %v331 = vld [vmem:[%s221 + $0x630] sm:$0xff]
                %332 = vst [vmem:[%s222 + $0x1b0] sm:$0xff] %v331
                %v333 = vld [vmem:[%s221 + $0x638] sm:$0xff]
                %334 = vst [vmem:[%s222 + $0x1b8] sm:$0xff] %v333
                %v335 = vld [vmem:[%s221 + $0x700] sm:$0xff]
                %336 = vst [vmem:[%s222 + $0x1c0] sm:$0xff] %v335
                %v337 = vld [vmem:[%s221 + $0x708] sm:$0xff]
                %338 = vst [vmem:[%s222 + $0x1c8] sm:$0xff] %v337
                %v339 = vld [vmem:[%s221 + $0x710] sm:$0xff]
                %340 = vst [vmem:[%s222 + $0x1d0] sm:$0xff] %v339
                %v341 = vld [vmem:[%s221 + $0x718] sm:$0xff]
                %342 = vst [vmem:[%s222 + $0x1d8] sm:$0xff] %v341
                %v343 = vld [vmem:[%s221 + $0x720] sm:$0xff]
                %344 = vst [vmem:[%s222 + $0x1e0] sm:$0xff] %v343
                %v345 = vld [vmem:[%s221 + $0x728] sm:$0xff]
                %346 = vst [vmem:[%s222 + $0x1e8] sm:$0xff] %v345
                %v347 = vld [vmem:[%s221 + $0x730] sm:$0xff]
                %348 = vst [vmem:[%s222 + $0x1f0] sm:$0xff] %v347
                %v349 = vld [vmem:[%s221 + $0x738] sm:$0xff]
                %350 = vst [vmem:[%s222 + $0x1f8] sm:$0xff] %v349
                %v351 = vld [vmem:[%s221 + $0x800] sm:$0xff]
                %352 = vst [vmem:[%s222 + $0x200] sm:$0xff] %v351
                %v353 = vld [vmem:[%s221 + $0x808] sm:$0xff]
                %354 = vst [vmem:[%s222 + $0x208] sm:$0xff] %v353
                %v355 = vld [vmem:[%s221 + $0x810] sm:$0xff]
                %356 = vst [vmem:[%s222 + $0x210] sm:$0xff] %v355
                %v357 = vld [vmem:[%s221 + $0x818] sm:$0xff]
                %358 = vst [vmem:[%s222 + $0x218] sm:$0xff] %v357
                %v359 = vld [vmem:[%s221 + $0x820] sm:$0xff]
                %360 = vst [vmem:[%s222 + $0x220] sm:$0xff] %v359
                %v361 = vld [vmem:[%s221 + $0x828] sm:$0xff]
                %362 = vst [vmem:[%s222 + $0x228] sm:$0xff] %v361
                %v363 = vld [vmem:[%s221 + $0x830] sm:$0xff]
                %364 = vst [vmem:[%s222 + $0x230] sm:$0xff] %v363
                %v365 = vld [vmem:[%s221 + $0x838] sm:$0xff]
                %366 = vst [vmem:[%s222 + $0x238] sm:$0xff] %v365
                %v367 = vld [vmem:[%s221 + $0x900] sm:$0xff]
                %368 = vst [vmem:[%s222 + $0x240] sm:$0xff] %v367
                %v369 = vld [vmem:[%s221 + $0x908] sm:$0xff]
                %370 = vst [vmem:[%s222 + $0x248] sm:$0xff] %v369
                %v371 = vld [vmem:[%s221 + $0x910] sm:$0xff]
                %372 = vst [vmem:[%s222 + $0x250] sm:$0xff] %v371
                %v373 = vld [vmem:[%s221 + $0x918] sm:$0xff]
                %374 = vst [vmem:[%s222 + $0x258] sm:$0xff] %v373
                %v375 = vld [vmem:[%s221 + $0x920] sm:$0xff]
                %376 = vst [vmem:[%s222 + $0x260] sm:$0xff] %v375
                %v377 = vld [vmem:[%s221 + $0x928] sm:$0xff]
                %378 = vst [vmem:[%s222 + $0x268] sm:$0xff] %v377
                %v379 = vld [vmem:[%s221 + $0x930] sm:$0xff]
                %380 = vst [vmem:[%s222 + $0x270] sm:$0xff] %v379
                %v381 = vld [vmem:[%s221 + $0x938] sm:$0xff]
                %382 = vst [vmem:[%s222 + $0x278] sm:$0xff] %v381
                %v383 = vld [vmem:[%s221 + $0xa00] sm:$0xff]
                %384 = vst [vmem:[%s222 + $0x280] sm:$0xff] %v383
                %v385 = vld [vmem:[%s221 + $0xa08] sm:$0xff]
                %386 = vst [vmem:[%s222 + $0x288] sm:$0xff] %v385
                %v387 = vld [vmem:[%s221 + $0xa10] sm:$0xff]
                %388 = vst [vmem:[%s222 + $0x290] sm:$0xff] %v387
                %v389 = vld [vmem:[%s221 + $0xa18] sm:$0xff]
                %390 = vst [vmem:[%s222 + $0x298] sm:$0xff] %v389
                %v391 = vld [vmem:[%s221 + $0xa20] sm:$0xff]
                %392 = vst [vmem:[%s222 + $0x2a0] sm:$0xff] %v391
                %v393 = vld [vmem:[%s221 + $0xa28] sm:$0xff]
                %394 = vst [vmem:[%s222 + $0x2a8] sm:$0xff] %v393
                %v395 = vld [vmem:[%s221 + $0xa30] sm:$0xff]
                %396 = vst [vmem:[%s222 + $0x2b0] sm:$0xff] %v395
                %v397 = vld [vmem:[%s221 + $0xa38] sm:$0xff]
                %398 = vst [vmem:[%s222 + $0x2b8] sm:$0xff] %v397
                %v399 = vld [vmem:[%s221 + $0xb00] sm:$0xff]
                %400 = vst [vmem:[%s222 + $0x2c0] sm:$0xff] %v399
                %v401 = vld [vmem:[%s221 + $0xb08] sm:$0xff]
                %402 = vst [vmem:[%s222 + $0x2c8] sm:$0xff] %v401
                %v403 = vld [vmem:[%s221 + $0xb10] sm:$0xff]
                %404 = vst [vmem:[%s222 + $0x2d0] sm:$0xff] %v403
                %v405 = vld [vmem:[%s221 + $0xb18] sm:$0xff]
                %406 = vst [vmem:[%s222 + $0x2d8] sm:$0xff] %v405
                %v407 = vld [vmem:[%s221 + $0xb20] sm:$0xff]
                %408 = vst [vmem:[%s222 + $0x2e0] sm:$0xff] %v407
                %v409 = vld [vmem:[%s221 + $0xb28] sm:$0xff]
                %410 = vst [vmem:[%s222 + $0x2e8] sm:$0xff] %v409
                %v411 = vld [vmem:[%s221 + $0xb30] sm:$0xff]
                %412 = vst [vmem:[%s222 + $0x2f0] sm:$0xff] %v411
                %v413 = vld [vmem:[%s221 + $0xb38] sm:$0xff]
                %414 = vst [vmem:[%s222 + $0x2f8] sm:$0xff] %v413
                %v415 = vld [vmem:[%s221 + $0xc00] sm:$0xff]
                %416 = vst [vmem:[%s222 + $0x300] sm:$0xff] %v415
                %v417 = vld [vmem:[%s221 + $0xc08] sm:$0xff]
                %418 = vst [vmem:[%s222 + $0x308] sm:$0xff] %v417
                %v419 = vld [vmem:[%s221 + $0xc10] sm:$0xff]
                %420 = vst [vmem:[%s222 + $0x310] sm:$0xff] %v419
                %v421 = vld [vmem:[%s221 + $0xc18] sm:$0xff]
                %422 = vst [vmem:[%s222 + $0x318] sm:$0xff] %v421
                %v423 = vld [vmem:[%s221 + $0xc20] sm:$0xff]
                %424 = vst [vmem:[%s222 + $0x320] sm:$0xff] %v423
                %v425 = vld [vmem:[%s221 + $0xc28] sm:$0xff]
                %426 = vst [vmem:[%s222 + $0x328] sm:$0xff] %v425
                %v427 = vld [vmem:[%s221 + $0xc30] sm:$0xff]
                %428 = vst [vmem:[%s222 + $0x330] sm:$0xff] %v427
                %v429 = vld [vmem:[%s221 + $0xc38] sm:$0xff]
                %430 = vst [vmem:[%s222 + $0x338] sm:$0xff] %v429
                %v431 = vld [vmem:[%s221 + $0xd00] sm:$0xff]
                %432 = vst [vmem:[%s222 + $0x340] sm:$0xff] %v431
                %v433 = vld [vmem:[%s221 + $0xd08] sm:$0xff]
                %434 = vst [vmem:[%s222 + $0x348] sm:$0xff] %v433
                %v435 = vld [vmem:[%s221 + $0xd10] sm:$0xff]
                %436 = vst [vmem:[%s222 + $0x350] sm:$0xff] %v435
                %v437 = vld [vmem:[%s221 + $0xd18] sm:$0xff]
                %438 = vst [vmem:[%s222 + $0x358] sm:$0xff] %v437
                %v439 = vld [vmem:[%s221 + $0xd20] sm:$0xff]
                %440 = vst [vmem:[%s222 + $0x360] sm:$0xff] %v439
                %v441 = vld [vmem:[%s221 + $0xd28] sm:$0xff]
                %442 = vst [vmem:[%s222 + $0x368] sm:$0xff] %v441
                %v443 = vld [vmem:[%s221 + $0xd30] sm:$0xff]
                %444 = vst [vmem:[%s222 + $0x370] sm:$0xff] %v443
                %v445 = vld [vmem:[%s221 + $0xd38] sm:$0xff]
                %446 = vst [vmem:[%s222 + $0x378] sm:$0xff] %v445
                %v447 = vld [vmem:[%s221 + $0xe00] sm:$0xff]
                %448 = vst [vmem:[%s222 + $0x380] sm:$0xff] %v447
                %v449 = vld [vmem:[%s221 + $0xe08] sm:$0xff]
                %450 = vst [vmem:[%s222 + $0x388] sm:$0xff] %v449
                %v451 = vld [vmem:[%s221 + $0xe10] sm:$0xff]
                %452 = vst [vmem:[%s222 + $0x390] sm:$0xff] %v451
                %v453 = vld [vmem:[%s221 + $0xe18] sm:$0xff]
                %454 = vst [vmem:[%s222 + $0x398] sm:$0xff] %v453
                %v455 = vld [vmem:[%s221 + $0xe20] sm:$0xff]
                %456 = vst [vmem:[%s222 + $0x3a0] sm:$0xff] %v455
                %v457 = vld [vmem:[%s221 + $0xe28] sm:$0xff]
                %458 = vst [vmem:[%s222 + $0x3a8] sm:$0xff] %v457
                %v459 = vld [vmem:[%s221 + $0xe30] sm:$0xff]
                %460 = vst [vmem:[%s222 + $0x3b0] sm:$0xff] %v459
                %v461 = vld [vmem:[%s221 + $0xe38] sm:$0xff]
                %462 = vst [vmem:[%s222 + $0x3b8] sm:$0xff] %v461
                %v463 = vld [vmem:[%s221 + $0xf00] sm:$0xff]
                %464 = vst [vmem:[%s222 + $0x3c0] sm:$0xff] %v463
                %v465 = vld [vmem:[%s221 + $0xf08] sm:$0xff]
                %466 = vst [vmem:[%s222 + $0x3c8] sm:$0xff] %v465
                %v467 = vld [vmem:[%s221 + $0xf10] sm:$0xff]
                %468 = vst [vmem:[%s222 + $0x3d0] sm:$0xff] %v467
                %v469 = vld [vmem:[%s221 + $0xf18] sm:$0xff]
                %470 = vst [vmem:[%s222 + $0x3d8] sm:$0xff] %v469
                %v471 = vld [vmem:[%s221 + $0xf20] sm:$0xff]
                %472 = vst [vmem:[%s222 + $0x3e0] sm:$0xff] %v471
                %v473 = vld [vmem:[%s221 + $0xf28] sm:$0xff]
                %474 = vst [vmem:[%s222 + $0x3e8] sm:$0xff] %v473
                %v475 = vld [vmem:[%s221 + $0xf30] sm:$0xff]
                %476 = vst [vmem:[%s222 + $0x3f0] sm:$0xff] %v475
                %v477 = vld [vmem:[%s221 + $0xf38] sm:$0xff]
                %478 = vst [vmem:[%s222 + $0x3f8] sm:$0xff] %v477
              $region37: #{conv_block_forward.2} parent=31 // loop_footer
                %s220 = sadd.s32 1, %s216
              $region38: #{conv_block_forward.2} parent=31 // loop_footer_branch
                %215 = sbr.rel target = $region34
              $region39: #{conv_block_forward.2} parent=31 // loop_exit
                _
            $region32: #{conv_block_forward.2} parent=27 // pred_fallthru
              _
            // Predicated region
            $region40: #{conv_block_forward.2} parent=27 // pred_check
              _
            $region41: #{conv_block_forward.2} parent=27 // pred_check_branch
              %480 = sbr.rel target = $region43
            $region42: #{conv_block_forward.2} parent=27 // pred_region
              _
            $region43: #{conv_block_forward.2} parent=27 // pred_fallthru
              _
          $region28: #{conv_block_forward.2} parent=23 // pred_fallthru
            _
          %481 = vnop
        $region24: #{conv_block_forward.2} parent=19 // pred_fallthru
          _
      $region20: #{conv_block_forward.2} parent=5 // pred_fallthru
        _
      %p482 = scmp.le.s32.totalorder 1, %s11
      %p483 = scmp.lt.s32.totalorder %s11, 5
      %p484 = pnand %p482, %p483
      %p485 = pneg %p484
      // Predicated region
      $region44: #{conv_block_forward.2} parent=5 // pred_check
        _
      $region45: #{conv_block_forward.2} parent=5 // pred_check_branch
        %487 = sbr.rel (%p484) target = $region47
      $region46: #{conv_block_forward.2} parent=5 // pred_region
        %s488 = ssub.s32 %s11, 1
        %s489 = sand.u32 %s49, 1
        %s490 = sand.u32 %s49, 1
        %s491 = smul.addr %s490, 1024
        %s492 = scalar_lea.vmem [#allocation2], %s491
        // Predicated region
        $region48: #{conv_block_forward.2} parent=46 // pred_check
          %p493 = pneg %p62
        $region49: #{conv_block_forward.2} parent=46 // pred_check_branch
          %495 = sbr.rel (%p493) target = $region51
        $region50: #{conv_block_forward.2} parent=46 // pred_region
          _
        $region51: #{conv_block_forward.2} parent=46 // pred_fallthru
          _
        %s496 = sand.u32 %s49, 1
        %s497 = sand.u32 %s49, 1
        %s498 = smul.addr %s497, 1024
        %s499 = scalar_lea.vmem [#allocation2], %s498
        %p500 = pneg %p62
        %p501 = pneg %p59
        %p502 = scmp.lt.s32.totalorder %s23, 0
        %s503 = scalar_select %p502, %s23, 0
        %s504 = smul.addr %s503, 8
        %s505 = scalar_lea.vmem %s1, %s504
        %p506 = pneg %p88
        %p507 = pneg %p85
        %p508 = pneg %p118
        %p509 = pneg %p115
        %s510 = smul.u32 %s21, 2
        %s511 = sadd.s32 %s510, %s22
        %s512 = smul.u32 8, %s511
        %p513 = scmp.lt.s32.totalorder %s512, 31
        %s514 = scalar_select %p513, %s512, 31
        %s515 = smul.addr %s514, 8
        %s516 = scalar_lea.vmem %s2, %s515
        %p517 = pneg %p144
        %p518 = pneg %p141
        %p519 = scmp.lt.s32.totalorder %s21, 1
        %s520 = scalar_select %p519, %s21, 1
        %s521 = smul.addr %s520, 8
        %s522 = scalar_lea.vmem %s3, %s521
        %p523 = pneg %p170
        %p524 = pneg %p167
        %p525 = scmp.lt.s32.totalorder %s21, 1
        %s526 = scalar_select %p525, %s21, 1
        %s527 = smul.addr %s526, 8
        %s528 = scalar_lea.vmem %s4, %s527
        %s529 = smul.u32 %s21, 2
        %s530 = sadd.s32 %s529, %s22
        %s531 = smul.u32 16, %s23
        %s532 = smul.u32 8, %s530
        %p533 = scmp.lt.s32.totalorder %s23, 0
        %s534 = scalar_select %p533, %s23, 0
        %s535 = smul.addr %s534, 8
        %s536 = scalar_lea.vmem %s1, %s535
        %s537 = smul.u32 %s21, 2
        %s538 = sadd.s32 %s537, %s22
        %s539 = smul.u32 8, %s538
        %p540 = scmp.lt.s32.totalorder %s539, 31
        %s541 = scalar_select %p540, %s539, 31
        %s542 = smul.addr %s541, 8
        %s543 = scalar_lea.vmem %s2, %s542
        %s544 = smul.u32 %s21, 2
        %s545 = sadd.s32 %s544, %s22
        %s546 = smul.u32 8, %s545
        %p547 = scmp.lt.s32.totalorder %s21, 1
        %s548 = scalar_select %p547, %s21, 1
        %s549 = smul.addr %s548, 8
        %s550 = scalar_lea.vmem %s3, %s549
        %p551 = scmp.lt.s32.totalorder %s21, 1
        %s552 = scalar_select %p551, %s21, 1
        %s553 = smul.addr %s552, 8
        %s554 = scalar_lea.vmem %s4, %s553
        %p555 = scmp.eq.s32.totalorder %s23, 0
        // Predicated region
        $region52: #{conv_block_forward.2} parent=46 // pred_check
          %p556 = pneg %p555
        $region53: #{conv_block_forward.2} parent=46 // pred_check_branch
          %558 = sbr.rel (%p556) target = $region55
        $region54: #{conv_block_forward.2} parent=46 // pred_region
          %559 = vst [vmem:[%s543] sm:$0xff] 0.0
          %560 = vst [vmem:[%s543 + $0x8] sm:$0xff] 0.0
          %561 = vst [vmem:[%s543 + $0x10] sm:$0xff] 0.0
          %562 = vst [vmem:[%s543 + $0x18] sm:$0xff] 0.0
          %563 = vst [vmem:[%s543 + $0x20] sm:$0xff] 0.0
          %564 = vst [vmem:[%s543 + $0x28] sm:$0xff] 0.0
          %565 = vst [vmem:[%s543 + $0x30] sm:$0xff] 0.0
          %566 = vst [vmem:[%s543 + $0x38] sm:$0xff] 0.0
        $region55: #{conv_block_forward.2} parent=46 // pred_fallthru
          _
        %v567 = vld [vmem:[%s543] sm:$0xff]
        %v568 = vld [vmem:[%s543 + $0x8] sm:$0xff]
        %v569 = vld [vmem:[%s543 + $0x10] sm:$0xff]
        %v570 = vld [vmem:[%s543 + $0x18] sm:$0xff]
        %v571 = vld [vmem:[%s543 + $0x20] sm:$0xff]
        %v572 = vld [vmem:[%s543 + $0x28] sm:$0xff]
        %v573 = vld [vmem:[%s543 + $0x30] sm:$0xff]
        %v574 = vld [vmem:[%s543 + $0x38] sm:$0xff]
        %v575 = vld [vmem:[%s536] sm:$0xff]
        %v576 = vld [vmem:[%s492] sm:$0xff]
        %v577 = vld [vmem:[%s492 + $0x8] sm:$0xff]
        %v578 = vld [vmem:[%s492 + $0x10] sm:$0xff]
        %v579 = vld [vmem:[%s492 + $0x18] sm:$0xff]
        %v580 = vld [vmem:[%s492 + $0x20] sm:$0xff]
        %v581 = vld [vmem:[%s492 + $0x28] sm:$0xff]
        %v582 = vld [vmem:[%s492 + $0x30] sm:$0xff]
        %v583 = vld [vmem:[%s492 + $0x38] sm:$0xff]
        %v584 = vld [vmem:[%s492 + $0x40] sm:$0xff]
        %v585 = vld [vmem:[%s492 + $0x48] sm:$0xff]
        %v586 = vld [vmem:[%s492 + $0x50] sm:$0xff]
        %v587 = vld [vmem:[%s492 + $0x58] sm:$0xff]
        %v588 = vld [vmem:[%s492 + $0x60] sm:$0xff]
        %v589 = vld [vmem:[%s492 + $0x68] sm:$0xff]
        %v590 = vld [vmem:[%s492 + $0x70] sm:$0xff]
        %v591 = vld [vmem:[%s492 + $0x78] sm:$0xff]
        %v592 = vld [vmem:[%s492 + $0x80] sm:$0xff]
        %v593 = vld [vmem:[%s492 + $0x88] sm:$0xff]
        %v594 = vld [vmem:[%s492 + $0x90] sm:$0xff]
        %v595 = vld [vmem:[%s492 + $0x98] sm:$0xff]
        %v596 = vld [vmem:[%s492 + $0xa0] sm:$0xff]
        %v597 = vld [vmem:[%s492 + $0xa8] sm:$0xff]
        %v598 = vld [vmem:[%s492 + $0xb0] sm:$0xff]
        %v599 = vld [vmem:[%s492 + $0xb8] sm:$0xff]
        %v600 = vld [vmem:[%s492 + $0xc0] sm:$0xff]
        %v601 = vld [vmem:[%s492 + $0xc8] sm:$0xff]
        %v602 = vld [vmem:[%s492 + $0xd0] sm:$0xff]
        %v603 = vld [vmem:[%s492 + $0xd8] sm:$0xff]
        %v604 = vld [vmem:[%s492 + $0xe0] sm:$0xff]
        %v605 = vld [vmem:[%s492 + $0xe8] sm:$0xff]
        %v606 = vld [vmem:[%s492 + $0xf0] sm:$0xff]
        %v607 = vld [vmem:[%s492 + $0xf8] sm:$0xff]
        %v608 = vld [vmem:[%s492 + $0x100] sm:$0xff]
        %v609 = vld [vmem:[%s492 + $0x108] sm:$0xff]
        %v610 = vld [vmem:[%s492 + $0x110] sm:$0xff]
        %v611 = vld [vmem:[%s492 + $0x118] sm:$0xff]
        %v612 = vld [vmem:[%s492 + $0x120] sm:$0xff]
        %v613 = vld [vmem:[%s492 + $0x128] sm:$0xff]
        %v614 = vld [vmem:[%s492 + $0x130] sm:$0xff]
        %v615 = vld [vmem:[%s492 + $0x138] sm:$0xff]
        %v616 = vld [vmem:[%s492 + $0x140] sm:$0xff]
        %v617 = vld [vmem:[%s492 + $0x148] sm:$0xff]
        %v618 = vld [vmem:[%s492 + $0x150] sm:$0xff]
        %v619 = vld [vmem:[%s492 + $0x158] sm:$0xff]
        %v620 = vld [vmem:[%s492 + $0x160] sm:$0xff]
        %v621 = vld [vmem:[%s492 + $0x168] sm:$0xff]
        %v622 = vld [vmem:[%s492 + $0x170] sm:$0xff]
        %v623 = vld [vmem:[%s492 + $0x178] sm:$0xff]
        %v624 = vld [vmem:[%s492 + $0x180] sm:$0xff]
        %v625 = vld [vmem:[%s492 + $0x188] sm:$0xff]
        %v626 = vld [vmem:[%s492 + $0x190] sm:$0xff]
        %v627 = vld [vmem:[%s492 + $0x198] sm:$0xff]
        %v628 = vld [vmem:[%s492 + $0x1a0] sm:$0xff]
        %v629 = vld [vmem:[%s492 + $0x1a8] sm:$0xff]
        %v630 = vld [vmem:[%s492 + $0x1b0] sm:$0xff]
        %v631 = vld [vmem:[%s492 + $0x1b8] sm:$0xff]
        %v632 = vld [vmem:[%s492 + $0x1c0] sm:$0xff]
        %v633 = vld [vmem:[%s492 + $0x1c8] sm:$0xff]
        %v634 = vld [vmem:[%s492 + $0x1d0] sm:$0xff]
        %v635 = vld [vmem:[%s492 + $0x1d8] sm:$0xff]
        %v636 = vld [vmem:[%s492 + $0x1e0] sm:$0xff]
        %v637 = vld [vmem:[%s492 + $0x1e8] sm:$0xff]
        %v638 = vld [vmem:[%s492 + $0x1f0] sm:$0xff]
        %v639 = vld [vmem:[%s492 + $0x1f8] sm:$0xff]
        %v640 = vld [vmem:[%s492 + $0x200] sm:$0xff]
        %v641 = vld [vmem:[%s492 + $0x208] sm:$0xff]
        %v642 = vld [vmem:[%s492 + $0x210] sm:$0xff]
        %v643 = vld [vmem:[%s492 + $0x218] sm:$0xff]
        %v644 = vld [vmem:[%s492 + $0x220] sm:$0xff]
        %v645 = vld [vmem:[%s492 + $0x228] sm:$0xff]
        %v646 = vld [vmem:[%s492 + $0x230] sm:$0xff]
        %v647 = vld [vmem:[%s492 + $0x238] sm:$0xff]
        %v648 = vld [vmem:[%s492 + $0x240] sm:$0xff]
        %v649 = vld [vmem:[%s492 + $0x248] sm:$0xff]
        %v650 = vld [vmem:[%s492 + $0x250] sm:$0xff]
        %v651 = vld [vmem:[%s492 + $0x258] sm:$0xff]
        %v652 = vld [vmem:[%s492 + $0x260] sm:$0xff]
        %v653 = vld [vmem:[%s492 + $0x268] sm:$0xff]
        %v654 = vld [vmem:[%s492 + $0x270] sm:$0xff]
        %v655 = vld [vmem:[%s492 + $0x278] sm:$0xff]
        %v656 = vld [vmem:[%s492 + $0x280] sm:$0xff]
        %v657 = vld [vmem:[%s492 + $0x288] sm:$0xff]
        %v658 = vld [vmem:[%s492 + $0x290] sm:$0xff]
        %v659 = vld [vmem:[%s492 + $0x298] sm:$0xff]
        %v660 = vld [vmem:[%s492 + $0x2a0] sm:$0xff]
        %v661 = vld [vmem:[%s492 + $0x2a8] sm:$0xff]
        %v662 = vld [vmem:[%s492 + $0x2b0] sm:$0xff]
        %v663 = vld [vmem:[%s492 + $0x2b8] sm:$0xff]
        %v664 = vld [vmem:[%s492 + $0x2c0] sm:$0xff]
        %v665 = vld [vmem:[%s492 + $0x2c8] sm:$0xff]
        %v666 = vld [vmem:[%s492 + $0x2d0] sm:$0xff]
        %v667 = vld [vmem:[%s492 + $0x2d8] sm:$0xff]
        %v668 = vld [vmem:[%s492 + $0x2e0] sm:$0xff]
        %v669 = vld [vmem:[%s492 + $0x2e8] sm:$0xff]
        %v670 = vld [vmem:[%s492 + $0x2f0] sm:$0xff]
        %v671 = vld [vmem:[%s492 + $0x2f8] sm:$0xff]
        %v672 = vld [vmem:[%s492 + $0x300] sm:$0xff]
        %v673 = vld [vmem:[%s492 + $0x308] sm:$0xff]
        %v674 = vld [vmem:[%s492 + $0x310] sm:$0xff]
        %v675 = vld [vmem:[%s492 + $0x318] sm:$0xff]
        %v676 = vld [vmem:[%s492 + $0x320] sm:$0xff]
        %v677 = vld [vmem:[%s492 + $0x328] sm:$0xff]
        %v678 = vld [vmem:[%s492 + $0x330] sm:$0xff]
        %v679 = vld [vmem:[%s492 + $0x338] sm:$0xff]
        %v680 = vld [vmem:[%s492 + $0x340] sm:$0xff]
        %v681 = vld [vmem:[%s492 + $0x348] sm:$0xff]
        %v682 = vld [vmem:[%s492 + $0x350] sm:$0xff]
        %v683 = vld [vmem:[%s492 + $0x358] sm:$0xff]
        %v684 = vld [vmem:[%s492 + $0x360] sm:$0xff]
        %v685 = vld [vmem:[%s492 + $0x368] sm:$0xff]
        %v686 = vld [vmem:[%s492 + $0x370] sm:$0xff]
        %v687 = vld [vmem:[%s492 + $0x378] sm:$0xff]
        %v688 = vld [vmem:[%s492 + $0x380] sm:$0xff]
        %v689 = vld [vmem:[%s492 + $0x388] sm:$0xff]
        %v690 = vld [vmem:[%s492 + $0x390] sm:$0xff]
        %v691 = vld [vmem:[%s492 + $0x398] sm:$0xff]
        %v692 = vld [vmem:[%s492 + $0x3a0] sm:$0xff]
        %v693 = vld [vmem:[%s492 + $0x3a8] sm:$0xff]
        %v694 = vld [vmem:[%s492 + $0x3b0] sm:$0xff]
        %v695 = vld [vmem:[%s492 + $0x3b8] sm:$0xff]
        %v696 = vld [vmem:[%s492 + $0x3c0] sm:$0xff]
        %v697 = vld [vmem:[%s492 + $0x3c8] sm:$0xff]
        %v698 = vld [vmem:[%s492 + $0x3d0] sm:$0xff]
        %v699 = vld [vmem:[%s492 + $0x3d8] sm:$0xff]
        %v700 = vld [vmem:[%s492 + $0x3e0] sm:$0xff]
        %v701 = vld [vmem:[%s492 + $0x3e8] sm:$0xff]
        %v702 = vld [vmem:[%s492 + $0x3f0] sm:$0xff]
        %v703 = vld [vmem:[%s492 + $0x3f8] sm:$0xff]
        %704 = vmatprep.subr.mxu0 %v697
        %705 = vmatpush1.msra.mxu0 %v696
        %706 = vmatprep.subr.mxu0 %v689
        %707 = vmatpush1.msra.mxu0 %v688
        %708 = vmatprep.subr.mxu0 %v681
        %709 = vmatpush1.msra.mxu0 %v680
        %710 = vmatprep.subr.mxu0 %v673
        %711 = vmatpush1.msra.mxu0 %v672
        %712 = vmatprep.subr.mxu0 %v665
        %713 = vmatpush1.msra.mxu0 %v664
        %714 = vmatprep.subr.mxu0 %v657
        %715 = vmatpush1.msra.mxu0 %v656
        %716 = vmatprep.subr.mxu0 %v649
        %717 = vmatpush1.msra.mxu0 %v648
        %718 = vmatprep.subr.mxu0 %v641
        %719 = vmatpush1.msra.mxu0 %v640
        %720 = vmatprep.subr.mxu0 %v633
        %721 = vmatpush1.msra.mxu0 %v632
        %722 = vmatprep.subr.mxu0 %v625
        %723 = vmatpush1.msra.mxu0 %v624
        %724 = vmatprep.subr.mxu0 %v617
        %725 = vmatpush1.msra.mxu0 %v616
        %726 = vmatprep.subr.mxu0 %v609
        %727 = vmatpush1.msra.mxu0 %v608
        %728 = vmatprep.subr.mxu0 %v601
        %729 = vmatpush1.msra.mxu0 %v600
        %730 = vmatprep.subr.mxu0 %v593
        %731 = vmatpush1.msra.mxu0 %v592
        %732 = vmatprep.subr.mxu0 %v585
        %733 = vmatpush1.msra.mxu0 %v584
        %734 = vmatprep.subr.mxu0 %v577
        %735 = vmatpush1.msra.mxu0 %v576
        %736 = vmatprep.subr.mxu0 0.0
        %737 = vmatpush2.msra.mxu0 0.0
        %738 = vmatprep.subr.mxu0 0.0
        %739 = vmatpush2.msra.mxu0 0.0
        %740 = vmatprep.subr.mxu0 0.0
        %741 = vmatpush2.msra.mxu0 0.0
        %742 = vmatprep.subr.mxu0 0.0
        %743 = vmatpush2.msra.mxu0 0.0
        %744 = vmatprep.subr.mxu0 0.0
        %745 = vmatpush2.msra.mxu0 0.0
        %746 = vmatprep.subr.mxu0 0.0
        %747 = vmatpush2.msra.mxu0 0.0
        %748 = vmatprep.subr.mxu0 0.0
        %749 = vmatpush2.msra.mxu0 0.0
        %750 = vmatprep.subr.mxu0 0.0
        %751 = vmatpush2.msra.mxu0 0.0
        %752 = vmatprep.subr.mxu0 0.0
        %753 = vmatpush2.msra.mxu0 0.0
        %754 = vmatprep.subr.mxu0 0.0
        %755 = vmatpush2.msra.mxu0 0.0
        %756 = vmatprep.subr.mxu0 0.0
        %757 = vmatpush2.msra.mxu0 0.0
        %758 = vmatprep.subr.mxu0 0.0
        %759 = vmatpush2.msra.mxu0 0.0
        %760 = vmatprep.subr.mxu0 0.0
        %761 = vmatpush2.msra.mxu0 0.0
        %762 = vmatprep.subr.mxu0 0.0
        %763 = vmatpush2.msra.mxu0 0.0
        %764 = vmatprep.subr.mxu0 0.0
        %765 = vmatpush2.msra.mxu0 0.0
        %766 = vmatprep.subr.mxu0 0.0
        %767 = vmatpush2.msra.mxu0 0.0
        %768 = vmatprep.mubr.f32.mxu0 0.0
        %769 = vmatmul.mubr.f32.gmra.mxu0 %v575
        %v770 = vpop.f32.mrf.mxu0
        %v771 = vadd.f32 0.0, %v770
        %v772 = vpop.f32.mrf.mxu0
        %v773 = vadd.f32 0.0, %v772
        %774 = vdwg.mxu0
        %775 = vmatprep.subr.mxu0 %v699
        %776 = vmatpush1.msra.mxu0 %v698
        %777 = vmatprep.subr.mxu0 %v691
        %778 = vmatpush1.msra.mxu0 %v690
        %779 = vmatprep.subr.mxu0 %v683
        %780 = vmatpush1.msra.mxu0 %v682
        %781 = vmatprep.subr.mxu0 %v675
        %782 = vmatpush1.msra.mxu0 %v674
        %783 = vmatprep.subr.mxu0 %v667
        %784 = vmatpush1.msra.mxu0 %v666
        %785 = vmatprep.subr.mxu0 %v659
        %786 = vmatpush1.msra.mxu0 %v658
        %787 = vmatprep.subr.mxu0 %v651
        %788 = vmatpush1.msra.mxu0 %v650
        %789 = vmatprep.subr.mxu0 %v643
        %790 = vmatpush1.msra.mxu0 %v642
        %791 = vmatprep.subr.mxu0 %v635
        %792 = vmatpush1.msra.mxu0 %v634
        %793 = vmatprep.subr.mxu0 %v627
        %794 = vmatpush1.msra.mxu0 %v626
        %795 = vmatprep.subr.mxu0 %v619
        %796 = vmatpush1.msra.mxu0 %v618
        %797 = vmatprep.subr.mxu0 %v611
        %798 = vmatpush1.msra.mxu0 %v610
        %799 = vmatprep.subr.mxu0 %v603
        %800 = vmatpush1.msra.mxu0 %v602
        %801 = vmatprep.subr.mxu0 %v595
        %802 = vmatpush1.msra.mxu0 %v594
        %803 = vmatprep.subr.mxu0 %v587
        %804 = vmatpush1.msra.mxu0 %v586
        %805 = vmatprep.subr.mxu0 %v579
        %806 = vmatpush1.msra.mxu0 %v578
        %807 = vmatprep.subr.mxu0 0.0
        %808 = vmatpush2.msra.mxu0 0.0
        %809 = vmatprep.subr.mxu0 0.0
        %810 = vmatpush2.msra.mxu0 0.0
        %811 = vmatprep.subr.mxu0 0.0
        %812 = vmatpush2.msra.mxu0 0.0
        %813 = vmatprep.subr.mxu0 0.0
        %814 = vmatpush2.msra.mxu0 0.0
        %815 = vmatprep.subr.mxu0 0.0
        %816 = vmatpush2.msra.mxu0 0.0
        %817 = vmatprep.subr.mxu0 0.0
        %818 = vmatpush2.msra.mxu0 0.0
        %819 = vmatprep.subr.mxu0 0.0
        %820 = vmatpush2.msra.mxu0 0.0
        %821 = vmatprep.subr.mxu0 0.0
        %822 = vmatpush2.msra.mxu0 0.0
        %823 = vmatprep.subr.mxu0 0.0
        %824 = vmatpush2.msra.mxu0 0.0
        %825 = vmatprep.subr.mxu0 0.0
        %826 = vmatpush2.msra.mxu0 0.0
        %827 = vmatprep.subr.mxu0 0.0
        %828 = vmatpush2.msra.mxu0 0.0
        %829 = vmatprep.subr.mxu0 0.0
        %830 = vmatpush2.msra.mxu0 0.0
        %831 = vmatprep.subr.mxu0 0.0
        %832 = vmatpush2.msra.mxu0 0.0
        %833 = vmatprep.subr.mxu0 0.0
        %834 = vmatpush2.msra.mxu0 0.0
        %835 = vmatprep.subr.mxu0 0.0
        %836 = vmatpush2.msra.mxu0 0.0
        %837 = vmatprep.subr.mxu0 0.0
        %838 = vmatpush2.msra.mxu0 0.0
        %839 = vmatprep.mubr.f32.mxu0 0.0
        %840 = vmatmul.mubr.f32.gmra.mxu0 %v575
        %v841 = vpop.f32.mrf.mxu0
        %v842 = vadd.f32 0.0, %v841
        %v843 = vpop.f32.mrf.mxu0
        %v844 = vadd.f32 0.0, %v843
        %845 = vdwg.mxu0
        %846 = vmatprep.subr.mxu0 %v701
        %847 = vmatpush1.msra.mxu0 %v700
        %848 = vmatprep.subr.mxu0 %v693
        %849 = vmatpush1.msra.mxu0 %v692
        %850 = vmatprep.subr.mxu0 %v685
        %851 = vmatpush1.msra.mxu0 %v684
        %852 = vmatprep.subr.mxu0 %v677
        %853 = vmatpush1.msra.mxu0 %v676
        %854 = vmatprep.subr.mxu0 %v669
        %855 = vmatpush1.msra.mxu0 %v668
        %856 = vmatprep.subr.mxu0 %v661
        %857 = vmatpush1.msra.mxu0 %v660
        %858 = vmatprep.subr.mxu0 %v653
        %859 = vmatpush1.msra.mxu0 %v652
        %860 = vmatprep.subr.mxu0 %v645
        %861 = vmatpush1.msra.mxu0 %v644
        %862 = vmatprep.subr.mxu0 %v637
        %863 = vmatpush1.msra.mxu0 %v636
        %864 = vmatprep.subr.mxu0 %v629
        %865 = vmatpush1.msra.mxu0 %v628
        %866 = vmatprep.subr.mxu0 %v621
        %867 = vmatpush1.msra.mxu0 %v620
        %868 = vmatprep.subr.mxu0 %v613
        %869 = vmatpush1.msra.mxu0 %v612
        %870 = vmatprep.subr.mxu0 %v605
        %871 = vmatpush1.msra.mxu0 %v604
        %872 = vmatprep.subr.mxu0 %v597
        %873 = vmatpush1.msra.mxu0 %v596
        %874 = vmatprep.subr.mxu0 %v589
        %875 = vmatpush1.msra.mxu0 %v588
        %876 = vmatprep.subr.mxu0 %v581
        %877 = vmatpush1.msra.mxu0 %v580
        %878 = vmatprep.subr.mxu0 0.0
        %879 = vmatpush2.msra.mxu0 0.0
        %880 = vmatprep.subr.mxu0 0.0
        %881 = vmatpush2.msra.mxu0 0.0
        %882 = vmatprep.subr.mxu0 0.0
        %883 = vmatpush2.msra.mxu0 0.0
        %884 = vmatprep.subr.mxu0 0.0
        %885 = vmatpush2.msra.mxu0 0.0
        %886 = vmatprep.subr.mxu0 0.0
        %887 = vmatpush2.msra.mxu0 0.0
        %888 = vmatprep.subr.mxu0 0.0
        %889 = vmatpush2.msra.mxu0 0.0
        %890 = vmatprep.subr.mxu0 0.0
        %891 = vmatpush2.msra.mxu0 0.0
        %892 = vmatprep.subr.mxu0 0.0
        %893 = vmatpush2.msra.mxu0 0.0
        %894 = vmatprep.subr.mxu0 0.0
        %895 = vmatpush2.msra.mxu0 0.0
        %896 = vmatprep.subr.mxu0 0.0
        %897 = vmatpush2.msra.mxu0 0.0
        %898 = vmatprep.subr.mxu0 0.0
        %899 = vmatpush2.msra.mxu0 0.0
        %900 = vmatprep.subr.mxu0 0.0
        %901 = vmatpush2.msra.mxu0 0.0
        %902 = vmatprep.subr.mxu0 0.0
        %903 = vmatpush2.msra.mxu0 0.0
        %904 = vmatprep.subr.mxu0 0.0
        %905 = vmatpush2.msra.mxu0 0.0
        %906 = vmatprep.subr.mxu0 0.0
        %907 = vmatpush2.msra.mxu0 0.0
        %908 = vmatprep.subr.mxu0 0.0
        %909 = vmatpush2.msra.mxu0 0.0
        %910 = vmatprep.mubr.f32.mxu0 0.0
        %911 = vmatmul.mubr.f32.gmra.mxu0 %v575
        %v912 = vpop.f32.mrf.mxu0
        %v913 = vadd.f32 0.0, %v912
        %v914 = vpop.f32.mrf.mxu0
        %v915 = vadd.f32 0.0, %v914
        %916 = vdwg.mxu0
        %917 = vmatprep.subr.mxu0 %v703
        %918 = vmatpush1.msra.mxu0 %v702
        %919 = vmatprep.subr.mxu0 %v695
        %920 = vmatpush1.msra.mxu0 %v694
        %921 = vmatprep.subr.mxu0 %v687
        %922 = vmatpush1.msra.mxu0 %v686
        %923 = vmatprep.subr.mxu0 %v679
        %924 = vmatpush1.msra.mxu0 %v678
        %925 = vmatprep.subr.mxu0 %v671
        %926 = vmatpush1.msra.mxu0 %v670
        %927 = vmatprep.subr.mxu0 %v663
        %928 = vmatpush1.msra.mxu0 %v662
        %929 = vmatprep.subr.mxu0 %v655
        %930 = vmatpush1.msra.mxu0 %v654
        %931 = vmatprep.subr.mxu0 %v647
        %932 = vmatpush1.msra.mxu0 %v646
        %933 = vmatprep.subr.mxu0 %v639
        %934 = vmatpush1.msra.mxu0 %v638
        %935 = vmatprep.subr.mxu0 %v631
        %936 = vmatpush1.msra.mxu0 %v630
        %937 = vmatprep.subr.mxu0 %v623
        %938 = vmatpush1.msra.mxu0 %v622
        %939 = vmatprep.subr.mxu0 %v615
        %940 = vmatpush1.msra.mxu0 %v614
        %941 = vmatprep.subr.mxu0 %v607
        %942 = vmatpush1.msra.mxu0 %v606
        %943 = vmatprep.subr.mxu0 %v599
        %944 = vmatpush1.msra.mxu0 %v598
        %945 = vmatprep.subr.mxu0 %v591
        %946 = vmatpush1.msra.mxu0 %v590
        %947 = vmatprep.subr.mxu0 %v583
        %948 = vmatpush1.msra.mxu0 %v582
        %949 = vmatprep.subr.mxu0 0.0
        %950 = vmatpush2.msra.mxu0 0.0
        %951 = vmatprep.subr.mxu0 0.0
        %952 = vmatpush2.msra.mxu0 0.0
        %953 = vmatprep.subr.mxu0 0.0
        %954 = vmatpush2.msra.mxu0 0.0
        %955 = vmatprep.subr.mxu0 0.0
        %956 = vmatpush2.msra.mxu0 0.0
        %957 = vmatprep.subr.mxu0 0.0
        %958 = vmatpush2.msra.mxu0 0.0
        %959 = vmatprep.subr.mxu0 0.0
        %960 = vmatpush2.msra.mxu0 0.0
        %961 = vmatprep.subr.mxu0 0.0
        %962 = vmatpush2.msra.mxu0 0.0
        %963 = vmatprep.subr.mxu0 0.0
        %964 = vmatpush2.msra.mxu0 0.0
        %965 = vmatprep.subr.mxu0 0.0
        %966 = vmatpush2.msra.mxu0 0.0
        %967 = vmatprep.subr.mxu0 0.0
        %968 = vmatpush2.msra.mxu0 0.0
        %969 = vmatprep.subr.mxu0 0.0
        %970 = vmatpush2.msra.mxu0 0.0
        %971 = vmatprep.subr.mxu0 0.0
        %972 = vmatpush2.msra.mxu0 0.0
        %973 = vmatprep.subr.mxu0 0.0
        %974 = vmatpush2.msra.mxu0 0.0
        %975 = vmatprep.subr.mxu0 0.0
        %976 = vmatpush2.msra.mxu0 0.0
        %977 = vmatprep.subr.mxu0 0.0
        %978 = vmatpush2.msra.mxu0 0.0
        %979 = vmatprep.subr.mxu0 0.0
        %980 = vmatpush2.msra.mxu0 0.0
        %981 = vmatprep.mubr.f32.mxu0 0.0
        %982 = vmatmul.mubr.f32.gmra.mxu0 %v575
        %v983 = vpop.f32.mrf.mxu0
        %v984 = vadd.f32 0.0, %v983
        %v985 = vpop.f32.mrf.mxu0
        %v986 = vadd.f32 0.0, %v985
        %987 = vdwg.mxu0
        %v988 = vadd.f32 %v567, %v771
        %v989 = vadd.f32 %v568, %v773
        %v990 = vadd.f32 %v569, %v842
        %v991 = vadd.f32 %v570, %v844
        %v992 = vadd.f32 %v571, %v913
        %v993 = vadd.f32 %v572, %v915
        %v994 = vadd.f32 %v573, %v984
        %v995 = vadd.f32 %v574, %v986
        %996 = vst [vmem:[%s543] sm:$0xff] %v988
        %997 = vst [vmem:[%s543 + $0x8] sm:$0xff] %v989
        %998 = vst [vmem:[%s543 + $0x10] sm:$0xff] %v990
        %999 = vst [vmem:[%s543 + $0x18] sm:$0xff] %v991
        %1000 = vst [vmem:[%s543 + $0x20] sm:$0xff] %v992
        %1001 = vst [vmem:[%s543 + $0x28] sm:$0xff] %v993
        %1002 = vst [vmem:[%s543 + $0x30] sm:$0xff] %v994
        %1003 = vst [vmem:[%s543 + $0x38] sm:$0xff] %v995
        %p1004 = scmp.eq.s32.totalorder %s22, 0
        %p1005 = pnand %p1004, %p555
        %p1006 = pneg %p1005
        // Predicated region
        $region56: #{conv_block_forward.2} parent=46 // pred_check
          _
        $region57: #{conv_block_forward.2} parent=46 // pred_check_branch
          %1008 = sbr.rel (%p1005) target = $region59
        $region58: #{conv_block_forward.2} parent=46 // pred_region
          %vm1009 = vcmask 7168
          %1010 = vst.msk [vmem:[%s550] sm:$0xff] %vm1009, 0.0
          %1011 = vst.msk [vmem:[%s554] sm:$0xff] %vm1009, 0.0
        $region59: #{conv_block_forward.2} parent=46 // pred_fallthru
          _
        // Predicated region
        $region60: #{conv_block_forward.2} parent=46 // pred_check
          %p1012 = pneg %p555
        $region61: #{conv_block_forward.2} parent=46 // pred_check_branch
          %1014 = sbr.rel (%p1012) target = $region63
        $region62: #{conv_block_forward.2} parent=46 // pred_region
          %v1015 = vld [vmem:[%s543] sm:$0xff]
          %v1016 = vld [vmem:[%s543 + $0x8] sm:$0xff]
          %v1017 = vld [vmem:[%s543 + $0x10] sm:$0xff]
          %v1018 = vld [vmem:[%s543 + $0x18] sm:$0xff]
          %v1019 = vld [vmem:[%s543 + $0x20] sm:$0xff]
          %v1020 = vld [vmem:[%s543 + $0x28] sm:$0xff]
          %v1021 = vld [vmem:[%s543 + $0x30] sm:$0xff]
          %v1022 = vld [vmem:[%s543 + $0x38] sm:$0xff]
          %v1023 = vld [vmem:[%s550] sm:$0xff]
          %v1024 = vadd.f32 %v1015, %v1016
          %v1025 = vadd.f32 %v1024, %v1017
          %v1026 = vadd.f32 %v1025, %v1018
          %v1027 = vadd.f32 %v1026, %v1019
          %v1028 = vadd.f32 %v1027, %v1020
          %v1029 = vadd.f32 %v1028, %v1021
          %v1030 = vadd.f32 %v1029, %v1022
          %1031 = vadd.xlane.f32.xlu0 %v1030
          %v1032 = vpop.xlane.xlu0 %1031
          %v1033 = vadd.f32 %v1023, %v1032
          %vm1034 = vcmask 7168
          %1035 = vst.msk [vmem:[%s550] sm:$0xff] %vm1034, %v1033
          %v1036 = vld [vmem:[%s554] sm:$0xff]
          %v1037 = vmul.f32 %v1015, %v1015
          %v1038 = vmul.f32 %v1016, %v1016
          %v1039 = vmul.f32 %v1017, %v1017
          %v1040 = vmul.f32 %v1018, %v1018
          %v1041 = vmul.f32 %v1019, %v1019
          %v1042 = vmul.f32 %v1020, %v1020
          %v1043 = vmul.f32 %v1021, %v1021
          %v1044 = vmul.f32 %v1022, %v1022
          %v1045 = vadd.f32 %v1037, %v1038
          %v1046 = vadd.f32 %v1045, %v1039
          %v1047 = vadd.f32 %v1046, %v1040
          %v1048 = vadd.f32 %v1047, %v1041
          %v1049 = vadd.f32 %v1048, %v1042
          %v1050 = vadd.f32 %v1049, %v1043
          %v1051 = vadd.f32 %v1050, %v1044
          %1052 = vadd.xlane.f32.xlu0 %v1051
          %v1053 = vpop.xlane.xlu0 %1052
          %v1054 = vadd.f32 %v1036, %v1053
          %1055 = vst.msk [vmem:[%s554] sm:$0xff] %vm1034, %v1054
        $region63: #{conv_block_forward.2} parent=46 // pred_fallthru
          _
        %s1056 = smul.u32 %s21, 2
        %s1057 = sadd.s32 %s1056, %s22
        %s1058 = smul.u32 8, %s1057
        %p1059 = scmp.lt.s32.totalorder %s1058, 31
        %s1060 = scalar_select %p1059, %s1058, 31
        %s1061 = smul.addr %s1060, 8
        %s1062 = scalar_lea.vmem %s2, %s1061
        %p1063 = scmp.lt.s32.totalorder %s21, 1
        %s1064 = scalar_select %p1063, %s21, 1
        %s1065 = smul.addr %s1064, 8
        %s1066 = scalar_lea.vmem %s3, %s1065
        %p1067 = scmp.lt.s32.totalorder %s21, 1
        %s1068 = scalar_select %p1067, %s21, 1
        %s1069 = smul.addr %s1068, 8
        %s1070 = scalar_lea.vmem %s4, %s1069
        // Predicated region
        $region64: #{conv_block_forward.2} parent=46 // pred_check
          %p1071 = pneg %p115
        $region65: #{conv_block_forward.2} parent=46 // pred_check_branch
          %1073 = sbr.rel (%p1071) target = $region67
        $region66: #{conv_block_forward.2} parent=46 // pred_region
          %s1074 = smul.u32 %s21, 2
          %s1075 = sadd.s32 %s1074, %s22
          %s1076 = smul.u32 8, %s1075
        $region67: #{conv_block_forward.2} parent=46 // pred_fallthru
          _
        // Predicated region
        $region68: #{conv_block_forward.2} parent=46 // pred_check
          %p1077 = pneg %p141
        $region69: #{conv_block_forward.2} parent=46 // pred_check_branch
          %1079 = sbr.rel (%p1077) target = $region71
        $region70: #{conv_block_forward.2} parent=46 // pred_region
          _
        $region71: #{conv_block_forward.2} parent=46 // pred_fallthru
          _
        // Predicated region
        $region72: #{conv_block_forward.2} parent=46 // pred_check
          %p1080 = pneg %p167
        $region73: #{conv_block_forward.2} parent=46 // pred_check_branch
          %1082 = sbr.rel (%p1080) target = $region75
        $region74: #{conv_block_forward.2} parent=46 // pred_region
          _
        $region75: #{conv_block_forward.2} parent=46 // pred_fallthru
          _
      $region47: #{conv_block_forward.2} parent=5 // pred_fallthru
        _
      %p1083 = scmp.le.s32.totalorder 2, %s11
      // Predicated region
      $region76: #{conv_block_forward.2} parent=5 // pred_check
        %p1084 = pneg %p1083
      $region77: #{conv_block_forward.2} parent=5 // pred_check_branch
        %1086 = sbr.rel (%p1084) target = $region79
      $region78: #{conv_block_forward.2} parent=5 // pred_region
        %s1087 = ssub.s32 %s11, 2
        // Predicated region
        $region80: #{conv_block_forward.2} parent=78 // pred_check
          %p1088 = pneg %p121
        $region81: #{conv_block_forward.2} parent=78 // pred_check_branch
          %1090 = sbr.rel (%p1088) target = $region83
        $region82: #{conv_block_forward.2} parent=78 // pred_region
          %s1091 = smul.u32 %s24, 2
          %s1092 = sadd.s32 %s1091, %s25
          %s1093 = smul.u32 8, %s1092
          %p1094 = scmp.lt.s32.totalorder %s1093, 31
          %s1095 = scalar_select %p1094, %s1093, 31
          %s1096 = smul.addr %s1095, 8
          %s1097 = scalar_lea.vmem %s2, %s1096
        $region83: #{conv_block_forward.2} parent=78 // pred_fallthru
          _
        // Predicated region
        $region84: #{conv_block_forward.2} parent=78 // pred_check
          %p1098 = pneg %p147
        $region85: #{conv_block_forward.2} parent=78 // pred_check_branch
          %1100 = sbr.rel (%p1098) target = $region87
        $region86: #{conv_block_forward.2} parent=78 // pred_region
          %p1101 = scmp.lt.s32.totalorder %s24, 1
          %s1102 = scalar_select %p1101, %s24, 1
          %s1103 = smul.addr %s1102, 8
          %s1104 = scalar_lea.vmem %s3, %s1103
        $region87: #{conv_block_forward.2} parent=78 // pred_fallthru
          _
        // Predicated region
        $region88: #{conv_block_forward.2} parent=78 // pred_check
          %p1105 = pneg %p173
        $region89: #{conv_block_forward.2} parent=78 // pred_check_branch
          %1107 = sbr.rel (%p1105) target = $region91
        $region90: #{conv_block_forward.2} parent=78 // pred_region
          %p1108 = scmp.lt.s32.totalorder %s24, 1
          %s1109 = scalar_select %p1108, %s24, 1
          %s1110 = smul.addr %s1109, 8
          %s1111 = scalar_lea.vmem %s4, %s1110
        $region91: #{conv_block_forward.2} parent=78 // pred_fallthru
          _
      $region79: #{conv_block_forward.2} parent=5 // pred_fallthru
        _
    $region6: #{conv_block_forward.2} parent=1 // loop_footer
      %s15 = sadd.s32 1, %s11
    $region7: #{conv_block_forward.2} parent=1 // loop_footer_branch
      %10 = sbr.rel target = $region3
    $region8: #{conv_block_forward.2} parent=1 // loop_exit
      _

</llo_original>
